<compile_context>
chip_gen: v6e
topology: v6e:2x2x1
jax: 0.10.0
libtpu: 0.0.40
codegen_flags: <defaults>
</compile_context>

<pallas_src>
import functools
import math

import jax
import jax.numpy as jnp
from jax import lax
from jax.experimental import pallas as pl
from jax.experimental.pallas import tpu as pltpu


def _round_up(x, m):
    return ((x + m - 1) // m) * m


# ---------------------------------------------------------------------------
# Kernel 1: batched GRU recurrence (one batch block of BM rows per grid step).
# ---------------------------------------------------------------------------
def gru_kernel(seq_ref, wih_ref, whh_ref, bih_ref, bhh_ref, hseq_ref, xp_ref,
               *, unroll):
    """seq_ref : (1, T*BM, D)  bf16 input block, row index = t*BM + b
       wih_ref : (D, 3*Hp)     bf16 GRU input weights, gates [r|z|n], lane-padded
       whh_ref : (Hp, 3*Hp)    bf16 GRU hidden weights
       bih_ref : (1, 3*Hp)     f32  GRU input bias
       bhh_ref : (1, 3*Hp)     f32  GRU hidden bias
       hseq_ref: (T, BM, Hp)   bf16 OUT: all hidden states (full-tile stores)
       xp_ref  : (T*BM, 3*Hp)  f32  scratch: hoisted input projection
    """
    T, BM, Hp = hseq_ref.shape

    # Hoisted input projection: ONE MXU matmul per block, off the serial path.
    xp_ref[...] = (
        jnp.dot(seq_ref[0], wih_ref[...], preferred_element_type=jnp.float32)
        + bih_ref[...])

    # Loop-invariant hidden weights/bias, loaded once.  (Explicit MXU weight
    # residency via pltpu.matmul_push_rhs intentionally not used; with BM rows
    # per push the weight-load cost is already amortized.)
    whh = whh_ref[...]          # (Hp, 3Hp) bf16
    bhh = bhh_ref[...]          # (1, 3Hp)  f32

    def step(t, h):
        r0 = pl.multiple_of(t * BM, BM)
        xp = xp_ref[pl.ds(r0, BM), :]                                 # (BM, 3Hp)
        hp = jnp.dot(h.astype(jnp.bfloat16), whh,
                     preferred_element_type=jnp.float32) + bhh        # (BM, 3Hp)
        r = jax.nn.sigmoid(xp[:, 0:Hp] + hp[:, 0:Hp])
        z = jax.nn.sigmoid(xp[:, Hp:2 * Hp] + hp[:, Hp:2 * Hp])
        n = jnp.tanh(xp[:, 2 * Hp:3 * Hp] + r * hp[:, 2 * Hp:3 * Hp])
        h_new = (1.0 - z) * n + z * h
        hseq_ref[t] = h_new.astype(hseq_ref.dtype)   # full (BM,Hp) tile store
        return h_new

    lax.fori_loop(0, T, step, jnp.zeros((BM, Hp), jnp.float32), unroll=unroll)

    # TODO(synk): nn.Dropout(0.2) is identity in eval mode; training-mode RNG
    # mask (pltpu.prng_random_bits) intentionally not implemented.


# ---------------------------------------------------------------------------
# Kernel 2: attention pooling over time on the lane-flattened hidden states.
# ---------------------------------------------------------------------------
def attention_pool_kernel(hs_ref, aw_ref, ab_ref, out_ref):
    """hs_ref : (T, NB)  bf16 hidden states, column index = b*Hp + h
       aw_ref : (T, T)   bf16 attention Linear weight (torch layout w[u, t])
       ab_ref : (T, 1)   f32  attention Linear bias
       out_ref: (1, NB)  f32  pooled vectors (lane-dense writeback)
    """
    hs = hs_ref[...]                                                  # (T, NB)
    # W[u, (b,h)] = sum_t aw[u, t] * hs[t, (b,h)] + ab[u]
    w = jnp.dot(aw_ref[...], hs, preferred_element_type=jnp.float32) + ab_ref[...]
    w_max = jnp.max(w, axis=0, keepdims=True)
    e = jnp.exp(w - w_max)
    # approx reciprocal (EUP slot, ~free): ~1e-3 rel. error in the softmax
    # weights; covered by the bf16-level test tolerance.
    probs = e * pl.reciprocal(jnp.sum(e, axis=0, keepdims=True), approx=True)
    out_ref[...] = jnp.sum(probs * hs.astype(jnp.float32), axis=0, keepdims=True)


# ---------------------------------------------------------------------------
# Parameters (torch-default layout/init) and wrapper.
# ---------------------------------------------------------------------------
def make_params(key, input_dim, time_step, hidden_dim):
    """Deterministic synthetic parameters matching torch's default init/layout."""
    ks = jax.random.split(key, 6)
    kg = 1.0 / math.sqrt(hidden_dim)
    ka = 1.0 / math.sqrt(time_step)
    # torch layout: weight_ih_l0 (3H, D), weight_hh_l0 (3H, H), gates [r, z, n]
    w_ih = jax.random.uniform(ks[0], (3 * hidden_dim, input_dim), jnp.float32, -kg, kg)
    w_hh = jax.random.uniform(ks[1], (3 * hidden_dim, hidden_dim), jnp.float32, -kg, kg)
    b_ih = jax.random.uniform(ks[2], (3 * hidden_dim,), jnp.float32, -kg, kg)
    b_hh = jax.random.uniform(ks[3], (3 * hidden_dim,), jnp.float32, -kg, kg)
    a_w = jax.random.uniform(ks[4], (time_step, time_step), jnp.float32, -ka, ka)
    a_b = jax.random.uniform(ks[5], (time_step,), jnp.float32, -ka, ka)
    return dict(w_ih=w_ih, w_hh=w_hh, b_ih=b_ih, b_hh=b_hh, a_w=a_w, a_b=a_b)


def sequence_encoder(seq, params, *, block_batch=128):
    """Wrapper: pads/reorders operands, launches the two kernels."""
    B, T, D = seq.shape
    H = params['w_hh'].shape[1]
    Hp = _round_up(max(H, 1), 128)   # lane-padded hidden; gates start on 128-lane edges

    # --- batch block: multiple of 8 (sublanes), bounded by a v7x-safe VMEM budget
    def k1_vmem_bytes(bm):
        seq_blk = 2 * T * bm * D * 2                       # bf16, double-buffered
        weights = 2 * (D * 3 * Hp + Hp * 3 * Hp) * 2 + 2 * 2 * 3 * Hp * 4
        xp = T * bm * 3 * Hp * 4                           # f32 scratch
        out_blk = 2 * T * bm * Hp * 2                      # bf16, double-buffered
        return seq_blk + weights + xp + out_blk

    BM = min(_round_up(block_batch, 8), _round_up(B, 8))
    while BM > 8 and k1_vmem_bytes(BM) > 40 * 2**20:       # headroom for v7x's 64 MiB
        BM = max(8, _round_up(BM // 2, 8))
    Bp = _round_up(B, BM)
    G = Bp // BM

    def split3(x):
        return x[:H], x[H:2 * H], x[2 * H:]

    # Input weights: torch (3H, D) -> (D, 3*Hp), each gate lane-aligned.
    wih = jnp.concatenate(
        [jnp.pad(w.T, ((0, 0), (0, Hp - H))) for w in split3(params['w_ih'])], axis=1)
    # Hidden weights: torch (3H, H) -> (Hp, 3*Hp); padded rows/cols are zero, so
    # padded hidden lanes stay exactly zero given h0 = 0.
    whh = jnp.concatenate(
        [jnp.pad(u.T, ((0, Hp - H), (0, Hp - H))) for u in split3(params['w_hh'])],
        axis=1)
    bih = jnp.concatenate(
        [jnp.pad(b, (0, Hp - H)) for b in split3(params['b_ih'])]).reshape(1, 3 * Hp)
    bhh = jnp.concatenate(
        [jnp.pad(b, (0, Hp - H)) for b in split3(params['b_hh'])]).reshape(1, 3 * Hp)

    # Batch pad + reorder to time-major within each batch block: (G, T*BM, D).
    seq_p = jnp.pad(seq, ((0, Bp - B), (0, 0), (0, 0))).astype(jnp.bfloat16)
    seq_blocks = jnp.transpose(seq_p.reshape(G, BM, T, D), (0, 2, 1, 3)).reshape(
        G, T * BM, D)

    wih_bf = wih.astype(jnp.bfloat16)
    whh_bf = whh.astype(jnp.bfloat16)
    aw_bf = params['a_w'].astype(jnp.bfloat16)
    ab = params['a_b'].astype(jnp.float32).reshape(T, 1)

    # Small BM -> per-step work is tiny, unroll helps; large BM -> per-step work
    # and live ranges are big, keep unroll small (avoid vreg spills).
    unroll = int(min(T, 8 if BM <= 32 else 2))

    # ------------------------- kernel 1: GRU recurrence ----------------------
    hseq = pl.pallas_call(
        functools.partial(gru_kernel, unroll=unroll),
        out_shape=jax.ShapeDtypeStruct((T, Bp, Hp), jnp.bfloat16),
        grid=(G,),
        in_specs=[
            pl.BlockSpec((1, T * BM, D), lambda g: (g, 0, 0)),
            pl.BlockSpec((D, 3 * Hp), lambda g: (0, 0)),
            pl.BlockSpec((Hp, 3 * Hp), lambda g: (0, 0)),
            pl.BlockSpec((1, 3 * Hp), lambda g: (0, 0)),
            pl.BlockSpec((1, 3 * Hp), lambda g: (0, 0)),
        ],
        out_specs=pl.BlockSpec((T, BM, Hp), lambda g: (0, g, 0)),
        scratch_shapes=[pltpu.VMEM((T * BM, 3 * Hp), jnp.float32)],
        compiler_params=pltpu.CompilerParams(
            dimension_semantics=("parallel",),       # megacore over batch blocks
            vmem_limit_bytes=int(min(48 * 2**20,
                                     max(16 * 2**20, 1.5 * k1_vmem_bytes(BM)))),
        ),
    )(seq_blocks, wih_bf, whh_bf, bih, bhh)

    # Free reshape in XLA (HBM is linear): (T, Bp, Hp) -> (T, Bp*Hp).
    hs_flat = hseq.reshape(T, Bp * Hp)

    # ------------------------- kernel 2: attention pooling -------------------
    NB = BM * Hp
    k2_vmem = 2 * T * NB * 2 + 2 * NB * 4 + 3 * T * NB * 4 + T * T * 2 + T * 4
    pooled = pl.pallas_call(
        attention_pool_kernel,
        out_shape=jax.ShapeDtypeStruct((1, Bp * Hp), jnp.float32),
        grid=(G,),
        in_specs=[
            pl.BlockSpec((T, NB), lambda j: (0, j)),
            pl.BlockSpec((T, T), lambda j: (0, 0)),
            pl.BlockSpec((T, 1), lambda j: (0, 0)),
        ],
        out_specs=pl.BlockSpec((1, NB), lambda j: (0, j)),
        compiler_params=pltpu.CompilerParams(
            dimension_semantics=("parallel",),
            vmem_limit_bytes=int(min(48 * 2**20, max(16 * 2**20, 1.5 * k2_vmem))),
        ),
    )(hs_flat, aw_bf, ab)

    out = pooled.reshape(Bp, Hp)[:B, :H]
    return out.reshape(B, 1, H)                     # = .view(-1, 1, dim)


def sequence_encoder_reference(seq, params):
    """Pure-JAX f32 reference mirroring the torch forward (eval mode)."""
    B, T, D = seq.shape
    H = params['w_hh'].shape[1]
    h = jnp.zeros((B, H), jnp.float32)
    hs = []
    for t in range(T):
        xp = seq[:, t, :] @ params['w_ih'].T + params['b_ih']
        hp = h @ params['w_hh'].T + params['b_hh']
        r = jax.nn.sigmoid(xp[:, :H] + hp[:, :H])
        z = jax.nn.sigmoid(xp[:, H:2 * H] + hp[:, H:2 * H])
        n = jnp.tanh(xp[:, 2 * H:] + r * hp[:, 2 * H:])
        h = (1.0 - z) * n + z * h
        hs.append(h)
    hs = jnp.stack(hs, axis=1)                              # (B, T, H)
    hs_t = jnp.transpose(hs, (0, 2, 1))                     # (B, H, T)
    w = hs_t @ params['a_w'].T + params['a_b']
    probs = jax.nn.softmax(w, axis=-1)
    probs_t = jnp.transpose(probs, (0, 2, 1))               # (B, T, H)
    vec = jnp.sum(probs_t * hs, axis=1)                     # (B, H)
    return vec.reshape(B, 1, H)


if __name__ == "__main__":
    B, T, D, H = 2, 8, 4, 32
    key = jax.random.PRNGKey(0)
    k_seq, k_par = jax.random.split(key)
    seq = jax.random.normal(k_seq, (B, T, D), jnp.float32)
    params = make_params(k_par, D, T, H)

    out = sequence_encoder(seq, params)
    jax.block_until_ready(out)

    ref = sequence_encoder_reference(seq, params)
    assert out.shape == (B, 1, H)
    # bf16 MXU operands + bf16 hidden-state storage + approx reciprocal vs f32
    # reference: 2e-2 is the standard bf16-level tolerance.
    assert jnp.allclose(out, ref, atol=2e-2, rtol=2e-2)

    print("KERNEL_OK")
</pallas_src>

<mosaic_0001>
module attributes {stable_mosaic.version = 11 : i64} {
  func.func @gru_kernel(%arg0: i32, %arg1: memref<1x64x4xbf16, #tpu.memory_space<vmem>>, %arg2: memref<4x384xbf16, #tpu.memory_space<vmem>>, %arg3: memref<128x384xbf16, #tpu.memory_space<vmem>>, %arg4: memref<1x384xf32, #tpu.memory_space<vmem>>, %arg5: memref<1x384xf32, #tpu.memory_space<vmem>>, %arg6: memref<8x8x128xbf16, #tpu.memory_space<vmem>>, %arg7: memref<64x384xf32, #tpu.memory_space<vmem>>) attributes {dimension_semantics = [#tpu.dimension_semantics<parallel>], iteration_bounds = array<i64: 1>, scalar_prefetch = 0 : i64, scratch_operands = 1 : i64, tpu.core_type = #tpu.core_type<tc>, window_params = [{transform_indices = @transform_0, window_bounds = array<i64: 1, 64, 4>}, {pipeline_mode = #tpu.pipeline_mode<synchronous>, transform_indices = @transform_1, window_bounds = array<i64: 4, 384>}, {pipeline_mode = #tpu.pipeline_mode<synchronous>, transform_indices = @transform_2, window_bounds = array<i64: 128, 384>}, {pipeline_mode = #tpu.pipeline_mode<synchronous>, transform_indices = @transform_3, window_bounds = array<i64: 1, 384>}, {pipeline_mode = #tpu.pipeline_mode<synchronous>, transform_indices = @transform_4, window_bounds = array<i64: 1, 384>}, {transform_indices = @transform_5, window_bounds = array<i64: 8, 8, 128>}]} {
    %c0 = arith.constant 0 : index
    %c0_0 = arith.constant 0 : index
    %c0_1 = arith.constant 0 : index
    %0 = vector.load %arg1[%c0, %c0_0, %c0_1] : memref<1x64x4xbf16, #tpu.memory_space<vmem>>, vector<1x64x4xbf16>
    %1 = vector.shape_cast %0 : vector<1x64x4xbf16> to vector<64x4xbf16>
    %c0_2 = arith.constant 0 : index
    %c0_3 = arith.constant 0 : index
    %2 = vector.load %arg2[%c0_2, %c0_3] : memref<4x384xbf16, #tpu.memory_space<vmem>>, vector<4x384xbf16>
    %cst = arith.constant dense<0.000000e+00> : vector<64x384xf32>
    %3 = tpu.matmul %1, %2, %cst {dimension_numbers = #tpu.dot_dimension_numbers<[1], [0], [0], [1], [0, 0, 1, 1], [], []>} : vector<64x4xbf16>, vector<4x384xbf16>, vector<64x384xf32> -> vector<64x384xf32>
    %c0_4 = arith.constant 0 : index
    %c0_5 = arith.constant 0 : index
    %4 = vector.load %arg4[%c0_4, %c0_5] : memref<1x384xf32, #tpu.memory_space<vmem>>, vector<1x384xf32>
    %5 = vector.broadcast %4 : vector<1x384xf32> to vector<64x384xf32>
    %6 = arith.addf %3, %5 : vector<64x384xf32>
    %c0_6 = arith.constant 0 : index
    %c0_7 = arith.constant 0 : index
    %7 = vector.load %arg7[%c0_6, %c0_7] : memref<64x384xf32, #tpu.memory_space<vmem>>, vector<64x384xf32>
    tpu.vector_store %arg7[%c0_6, %c0_7], %6 {strides = array<i32>} : memref<64x384xf32, #tpu.memory_space<vmem>>, vector<64x384xf32>,
    %c0_8 = arith.constant 0 : index
    %c0_9 = arith.constant 0 : index
    %8 = vector.load %arg3[%c0_8, %c0_9] : memref<128x384xbf16, #tpu.memory_space<vmem>>, vector<128x384xbf16>
    %c0_10 = arith.constant 0 : index
    %c0_11 = arith.constant 0 : index
    %9 = vector.load %arg5[%c0_10, %c0_11] : memref<1x384xf32, #tpu.memory_space<vmem>>, vector<1x384xf32>
    %cst_12 = arith.constant 0.000000e+00 : f32
    %10 = vector.broadcast %cst_12 : f32 to vector<8x128xf32>
    %c0_i32 = arith.constant 0 : i32
    %c8_i32 = arith.constant 8 : i32
    %11 = arith.muli %c0_i32, %c8_i32 : i32
    %12 = tpu.assume_multiple %11, 8 : i32
    %13 = arith.index_cast %12 : i32 to index
    %c0_13 = arith.constant 0 : index
    %14 = vector.load %arg7[%13, %c0_13] : memref<64x384xf32, #tpu.memory_space<vmem>>, vector<8x384xf32>
    %15 = arith.truncf %10 : vector<8x128xf32> to vector<8x128xbf16>
    %cst_14 = arith.constant dense<0.000000e+00> : vector<8x384xf32>
    %16 = tpu.matmul %15, %8, %cst_14 {dimension_numbers = #tpu.dot_dimension_numbers<[1], [0], [0], [1], [0, 0, 1, 1], [], []>} : vector<8x128xbf16>, vector<128x384xbf16>, vector<8x384xf32> -> vector<8x384xf32>
    %17 = vector.broadcast %9 : vector<1x384xf32> to vector<8x384xf32>
    %18 = arith.addf %16, %17 : vector<8x384xf32>
    %19 = vector.extract_strided_slice %14 {offsets = [0, 0], sizes = [8, 128], strides = [1, 1]} : vector<8x384xf32> to vector<8x128xf32>
    %20 = vector.extract_strided_slice %18 {offsets = [0, 0], sizes = [8, 128], strides = [1, 1]} : vector<8x384xf32> to vector<8x128xf32>
    %21 = arith.addf %19, %20 : vector<8x128xf32>
    %22 = arith.negf %21 : vector<8x128xf32>
    %23 = math.exp %22 : vector<8x128xf32>
    %cst_15 = arith.constant 1.000000e+00 : f32
    %24 = vector.broadcast %cst_15 : f32 to vector<8x128xf32>
    %25 = arith.addf %24, %23 : vector<8x128xf32>
    %26 = arith.divf %24, %25 : vector<8x128xf32>
    %27 = vector.extract_strided_slice %14 {offsets = [0, 128], sizes = [8, 128], strides = [1, 1]} : vector<8x384xf32> to vector<8x128xf32>
    %28 = vector.extract_strided_slice %18 {offsets = [0, 128], sizes = [8, 128], strides = [1, 1]} : vector<8x384xf32> to vector<8x128xf32>
    %29 = arith.addf %27, %28 : vector<8x128xf32>
    %30 = arith.negf %29 : vector<8x128xf32>
    %31 = math.exp %30 : vector<8x128xf32>
    %cst_16 = arith.constant 1.000000e+00 : f32
    %32 = vector.broadcast %cst_16 : f32 to vector<8x128xf32>
    %33 = arith.addf %32, %31 : vector<8x128xf32>
    %34 = arith.divf %32, %33 : vector<8x128xf32>
    %35 = vector.extract_strided_slice %14 {offsets = [0, 256], sizes = [8, 128], strides = [1, 1]} : vector<8x384xf32> to vector<8x128xf32>
    %36 = vector.extract_strided_slice %18 {offsets = [0, 256], sizes = [8, 128], strides = [1, 1]} : vector<8x384xf32> to vector<8x128xf32>
    %37 = arith.mulf %26, %36 : vector<8x128xf32>
    %38 = arith.addf %35, %37 : vector<8x128xf32>
    %39 = math.tanh %38 : vector<8x128xf32>
    %cst_17 = arith.constant 1.000000e+00 : f32
    %40 = vector.broadcast %cst_17 : f32 to vector<8x128xf32>
    %41 = arith.subf %40, %34 : vector<8x128xf32>
    %42 = arith.mulf %41, %39 : vector<8x128xf32>
    %43 = arith.mulf %34, %10 : vector<8x128xf32>
    %44 = arith.addf %42, %43 : vector<8x128xf32>
    %45 = arith.truncf %44 : vector<8x128xf32> to vector<8x128xbf16>
    %46 = arith.index_cast %c0_i32 : i32 to index
    %c0_18 = arith.constant 0 : index
    %c0_19 = arith.constant 0 : index
    %47 = vector.load %arg6[%46, %c0_18, %c0_19] : memref<8x8x128xbf16, #tpu.memory_space<vmem>>, vector<1x8x128xbf16>
    %48 = vector.shape_cast %47 : vector<1x8x128xbf16> to vector<8x128xbf16>
    %49 = vector.shape_cast %45 : vector<8x128xbf16> to vector<1x8x128xbf16>
    tpu.vector_store %arg6[%46, %c0_18, %c0_19], %49 {strides = array<i32>} : memref<8x8x128xbf16, #tpu.memory_space<vmem>>, vector<1x8x128xbf16>,
    %c1_i32 = arith.constant 1 : i32
    %c8_i32_20 = arith.constant 8 : i32
    %50 = arith.muli %c1_i32, %c8_i32_20 : i32
    %51 = tpu.assume_multiple %50, 8 : i32
    %52 = arith.index_cast %51 : i32 to index
    %c0_21 = arith.constant 0 : index
    %53 = vector.load %arg7[%52, %c0_21] : memref<64x384xf32, #tpu.memory_space<vmem>>, vector<8x384xf32>
    %54 = arith.truncf %44 : vector<8x128xf32> to vector<8x128xbf16>
    %cst_22 = arith.constant dense<0.000000e+00> : vector<8x384xf32>
    %55 = tpu.matmul %54, %8, %cst_22 {dimension_numbers = #tpu.dot_dimension_numbers<[1], [0], [0], [1], [0, 0, 1, 1], [], []>} : vector<8x128xbf16>, vector<128x384xbf16>, vector<8x384xf32> -> vector<8x384xf32>
    %56 = vector.broadcast %9 : vector<1x384xf32> to vector<8x384xf32>
    %57 = arith.addf %55, %56 : vector<8x384xf32>
    %58 = vector.extract_strided_slice %53 {offsets = [0, 0], sizes = [8, 128], strides = [1, 1]} : vector<8x384xf32> to vector<8x128xf32>
    %59 = vector.extract_strided_slice %57 {offsets = [0, 0], sizes = [8, 128], strides = [1, 1]} : vector<8x384xf32> to vector<8x128xf32>
    %60 = arith.addf %58, %59 : vector<8x128xf32>
    %61 = arith.negf %60 : vector<8x128xf32>
    %62 = math.exp %61 : vector<8x128xf32>
    %cst_23 = arith.constant 1.000000e+00 : f32
    %63 = vector.broadcast %cst_23 : f32 to vector<8x128xf32>
    %64 = arith.addf %63, %62 : vector<8x128xf32>
    %65 = arith.divf %63, %64 : vector<8x128xf32>
    %66 = vector.extract_strided_slice %53 {offsets = [0, 128], sizes = [8, 128], strides = [1, 1]} : vector<8x384xf32> to vector<8x128xf32>
    %67 = vector.extract_strided_slice %57 {offsets = [0, 128], sizes = [8, 128], strides = [1, 1]} : vector<8x384xf32> to vector<8x128xf32>
    %68 = arith.addf %66, %67 : vector<8x128xf32>
    %69 = arith.negf %68 : vector<8x128xf32>
    %70 = math.exp %69 : vector<8x128xf32>
    %cst_24 = arith.constant 1.000000e+00 : f32
    %71 = vector.broadcast %cst_24 : f32 to vector<8x128xf32>
    %72 = arith.addf %71, %70 : vector<8x128xf32>
    %73 = arith.divf %71, %72 : vector<8x128xf32>
    %74 = vector.extract_strided_slice %53 {offsets = [0, 256], sizes = [8, 128], strides = [1, 1]} : vector<8x384xf32> to vector<8x128xf32>
    %75 = vector.extract_strided_slice %57 {offsets = [0, 256], sizes = [8, 128], strides = [1, 1]} : vector<8x384xf32> to vector<8x128xf32>
    %76 = arith.mulf %65, %75 : vector<8x128xf32>
    %77 = arith.addf %74, %76 : vector<8x128xf32>
    %78 = math.tanh %77 : vector<8x128xf32>
    %cst_25 = arith.constant 1.000000e+00 : f32
    %79 = vector.broadcast %cst_25 : f32 to vector<8x128xf32>
    %80 = arith.subf %79, %73 : vector<8x128xf32>
    %81 = arith.mulf %80, %78 : vector<8x128xf32>
    %82 = arith.mulf %73, %44 : vector<8x128xf32>
    %83 = arith.addf %81, %82 : vector<8x128xf32>
    %84 = arith.truncf %83 : vector<8x128xf32> to vector<8x128xbf16>
    %85 = arith.index_cast %c1_i32 : i32 to index
    %c0_26 = arith.constant 0 : index
    %c0_27 = arith.constant 0 : index
    %86 = vector.load %arg6[%85, %c0_26, %c0_27] : memref<8x8x128xbf16, #tpu.memory_space<vmem>>, vector<1x8x128xbf16>
    %87 = vector.shape_cast %86 : vector<1x8x128xbf16> to vector<8x128xbf16>
    %88 = vector.shape_cast %84 : vector<8x128xbf16> to vector<1x8x128xbf16>
    tpu.vector_store %arg6[%85, %c0_26, %c0_27], %88 {strides = array<i32>} : memref<8x8x128xbf16, #tpu.memory_space<vmem>>, vector<1x8x128xbf16>,
    %c2_i32 = arith.constant 2 : i32
    %c8_i32_28 = arith.constant 8 : i32
    %89 = arith.muli %c2_i32, %c8_i32_28 : i32
    %90 = tpu.assume_multiple %89, 8 : i32
    %91 = arith.index_cast %90 : i32 to index
    %c0_29 = arith.constant 0 : index
    %92 = vector.load %arg7[%91, %c0_29] : memref<64x384xf32, #tpu.memory_space<vmem>>, vector<8x384xf32>
    %93 = arith.truncf %83 : vector<8x128xf32> to vector<8x128xbf16>
    %cst_30 = arith.constant dense<0.000000e+00> : vector<8x384xf32>
    %94 = tpu.matmul %93, %8, %cst_30 {dimension_numbers = #tpu.dot_dimension_numbers<[1], [0], [0], [1], [0, 0, 1, 1], [], []>} : vector<8x128xbf16>, vector<128x384xbf16>, vector<8x384xf32> -> vector<8x384xf32>
    %95 = vector.broadcast %9 : vector<1x384xf32> to vector<8x384xf32>
    %96 = arith.addf %94, %95 : vector<8x384xf32>
    %97 = vector.extract_strided_slice %92 {offsets = [0, 0], sizes = [8, 128], strides = [1, 1]} : vector<8x384xf32> to vector<8x128xf32>
    %98 = vector.extract_strided_slice %96 {offsets = [0, 0], sizes = [8, 128], strides = [1, 1]} : vector<8x384xf32> to vector<8x128xf32>
    %99 = arith.addf %97, %98 : vector<8x128xf32>
    %100 = arith.negf %99 : vector<8x128xf32>
    %101 = math.exp %100 : vector<8x128xf32>
    %cst_31 = arith.constant 1.000000e+00 : f32
    %102 = vector.broadcast %cst_31 : f32 to vector<8x128xf32>
    %103 = arith.addf %102, %101 : vector<8x128xf32>
    %104 = arith.divf %102, %103 : vector<8x128xf32>
    %105 = vector.extract_strided_slice %92 {offsets = [0, 128], sizes = [8, 128], strides = [1, 1]} : vector<8x384xf32> to vector<8x128xf32>
    %106 = vector.extract_strided_slice %96 {offsets = [0, 128], sizes = [8, 128], strides = [1, 1]} : vector<8x384xf32> to vector<8x128xf32>
    %107 = arith.addf %105, %106 : vector<8x128xf32>
    %108 = arith.negf %107 : vector<8x128xf32>
    %109 = math.exp %108 : vector<8x128xf32>
    %cst_32 = arith.constant 1.000000e+00 : f32
    %110 = vector.broadcast %cst_32 : f32 to vector<8x128xf32>
    %111 = arith.addf %110, %109 : vector<8x128xf32>
    %112 = arith.divf %110, %111 : vector<8x128xf32>
    %113 = vector.extract_strided_slice %92 {offsets = [0, 256], sizes = [8, 128], strides = [1, 1]} : vector<8x384xf32> to vector<8x128xf32>
    %114 = vector.extract_strided_slice %96 {offsets = [0, 256], sizes = [8, 128], strides = [1, 1]} : vector<8x384xf32> to vector<8x128xf32>
    %115 = arith.mulf %104, %114 : vector<8x128xf32>
    %116 = arith.addf %113, %115 : vector<8x128xf32>
    %117 = math.tanh %116 : vector<8x128xf32>
    %cst_33 = arith.constant 1.000000e+00 : f32
    %118 = vector.broadcast %cst_33 : f32 to vector<8x128xf32>
    %119 = arith.subf %118, %112 : vector<8x128xf32>
    %120 = arith.mulf %119, %117 : vector<8x128xf32>
    %121 = arith.mulf %112, %83 : vector<8x128xf32>
    %122 = arith.addf %120, %121 : vector<8x128xf32>
    %123 = arith.truncf %122 : vector<8x128xf32> to vector<8x128xbf16>
    %124 = arith.index_cast %c2_i32 : i32 to index
    %c0_34 = arith.constant 0 : index
    %c0_35 = arith.constant 0 : index
    %125 = vector.load %arg6[%124, %c0_34, %c0_35] : memref<8x8x128xbf16, #tpu.memory_space<vmem>>, vector<1x8x128xbf16>
    %126 = vector.shape_cast %125 : vector<1x8x128xbf16> to vector<8x128xbf16>
    %127 = vector.shape_cast %123 : vector<8x128xbf16> to vector<1x8x128xbf16>
    tpu.vector_store %arg6[%124, %c0_34, %c0_35], %127 {strides = array<i32>} : memref<8x8x128xbf16, #tpu.memory_space<vmem>>, vector<1x8x128xbf16>,
    %c3_i32 = arith.constant 3 : i32
    %c8_i32_36 = arith.constant 8 : i32
    %128 = arith.muli %c3_i32, %c8_i32_36 : i32
    %129 = tpu.assume_multiple %128, 8 : i32
    %130 = arith.index_cast %129 : i32 to index
    %c0_37 = arith.constant 0 : index
    %131 = vector.load %arg7[%130, %c0_37] : memref<64x384xf32, #tpu.memory_space<vmem>>, vector<8x384xf32>
    %132 = arith.truncf %122 : vector<8x128xf32> to vector<8x128xbf16>
    %cst_38 = arith.constant dense<0.000000e+00> : vector<8x384xf32>
    %133 = tpu.matmul %132, %8, %cst_38 {dimension_numbers = #tpu.dot_dimension_numbers<[1], [0], [0], [1], [0, 0, 1, 1], [], []>} : vector<8x128xbf16>, vector<128x384xbf16>, vector<8x384xf32> -> vector<8x384xf32>
    %134 = vector.broadcast %9 : vector<1x384xf32> to vector<8x384xf32>
    %135 = arith.addf %133, %134 : vector<8x384xf32>
    %136 = vector.extract_strided_slice %131 {offsets = [0, 0], sizes = [8, 128], strides = [1, 1]} : vector<8x384xf32> to vector<8x128xf32>
    %137 = vector.extract_strided_slice %135 {offsets = [0, 0], sizes = [8, 128], strides = [1, 1]} : vector<8x384xf32> to vector<8x128xf32>
    %138 = arith.addf %136, %137 : vector<8x128xf32>
    %139 = arith.negf %138 : vector<8x128xf32>
    %140 = math.exp %139 : vector<8x128xf32>
    %cst_39 = arith.constant 1.000000e+00 : f32
    %141 = vector.broadcast %cst_39 : f32 to vector<8x128xf32>
    %142 = arith.addf %141, %140 : vector<8x128xf32>
    %143 = arith.divf %141, %142 : vector<8x128xf32>
    %144 = vector.extract_strided_slice %131 {offsets = [0, 128], sizes = [8, 128], strides = [1, 1]} : vector<8x384xf32> to vector<8x128xf32>
    %145 = vector.extract_strided_slice %135 {offsets = [0, 128], sizes = [8, 128], strides = [1, 1]} : vector<8x384xf32> to vector<8x128xf32>
    %146 = arith.addf %144, %145 : vector<8x128xf32>
    %147 = arith.negf %146 : vector<8x128xf32>
    %148 = math.exp %147 : vector<8x128xf32>
    %cst_40 = arith.constant 1.000000e+00 : f32
    %149 = vector.broadcast %cst_40 : f32 to vector<8x128xf32>
    %150 = arith.addf %149, %148 : vector<8x128xf32>
    %151 = arith.divf %149, %150 : vector<8x128xf32>
    %152 = vector.extract_strided_slice %131 {offsets = [0, 256], sizes = [8, 128], strides = [1, 1]} : vector<8x384xf32> to vector<8x128xf32>
    %153 = vector.extract_strided_slice %135 {offsets = [0, 256], sizes = [8, 128], strides = [1, 1]} : vector<8x384xf32> to vector<8x128xf32>
    %154 = arith.mulf %143, %153 : vector<8x128xf32>
    %155 = arith.addf %152, %154 : vector<8x128xf32>
    %156 = math.tanh %155 : vector<8x128xf32>
    %cst_41 = arith.constant 1.000000e+00 : f32
    %157 = vector.broadcast %cst_41 : f32 to vector<8x128xf32>
    %158 = arith.subf %157, %151 : vector<8x128xf32>
    %159 = arith.mulf %158, %156 : vector<8x128xf32>
    %160 = arith.mulf %151, %122 : vector<8x128xf32>
    %161 = arith.addf %159, %160 : vector<8x128xf32>
    %162 = arith.truncf %161 : vector<8x128xf32> to vector<8x128xbf16>
    %163 = arith.index_cast %c3_i32 : i32 to index
    %c0_42 = arith.constant 0 : index
    %c0_43 = arith.constant 0 : index
    %164 = vector.load %arg6[%163, %c0_42, %c0_43] : memref<8x8x128xbf16, #tpu.memory_space<vmem>>, vector<1x8x128xbf16>
    %165 = vector.shape_cast %164 : vector<1x8x128xbf16> to vector<8x128xbf16>
    %166 = vector.shape_cast %162 : vector<8x128xbf16> to vector<1x8x128xbf16>
    tpu.vector_store %arg6[%163, %c0_42, %c0_43], %166 {strides = array<i32>} : memref<8x8x128xbf16, #tpu.memory_space<vmem>>, vector<1x8x128xbf16>,
    %c4_i32 = arith.constant 4 : i32
    %c8_i32_44 = arith.constant 8 : i32
    %167 = arith.muli %c4_i32, %c8_i32_44 : i32
    %168 = tpu.assume_multiple %167, 8 : i32
    %169 = arith.index_cast %168 : i32 to index
    %c0_45 = arith.constant 0 : index
    %170 = vector.load %arg7[%169, %c0_45] : memref<64x384xf32, #tpu.memory_space<vmem>>, vector<8x384xf32>
    %171 = arith.truncf %161 : vector<8x128xf32> to vector<8x128xbf16>
    %cst_46 = arith.constant dense<0.000000e+00> : vector<8x384xf32>
    %172 = tpu.matmul %171, %8, %cst_46 {dimension_numbers = #tpu.dot_dimension_numbers<[1], [0], [0], [1], [0, 0, 1, 1], [], []>} : vector<8x128xbf16>, vector<128x384xbf16>, vector<8x384xf32> -> vector<8x384xf32>
    %173 = vector.broadcast %9 : vector<1x384xf32> to vector<8x384xf32>
    %174 = arith.addf %172, %173 : vector<8x384xf32>
    %175 = vector.extract_strided_slice %170 {offsets = [0, 0], sizes = [8, 128], strides = [1, 1]} : vector<8x384xf32> to vector<8x128xf32>
    %176 = vector.extract_strided_slice %174 {offsets = [0, 0], sizes = [8, 128], strides = [1, 1]} : vector<8x384xf32> to vector<8x128xf32>
    %177 = arith.addf %175, %176 : vector<8x128xf32>
    %178 = arith.negf %177 : vector<8x128xf32>
    %179 = math.exp %178 : vector<8x128xf32>
    %cst_47 = arith.constant 1.000000e+00 : f32
    %180 = vector.broadcast %cst_47 : f32 to vector<8x128xf32>
    %181 = arith.addf %180, %179 : vector<8x128xf32>
    %182 = arith.divf %180, %181 : vector<8x128xf32>
    %183 = vector.extract_strided_slice %170 {offsets = [0, 128], sizes = [8, 128], strides = [1, 1]} : vector<8x384xf32> to vector<8x128xf32>
    %184 = vector.extract_strided_slice %174 {offsets = [0, 128], sizes = [8, 128], strides = [1, 1]} : vector<8x384xf32> to vector<8x128xf32>
    %185 = arith.addf %183, %184 : vector<8x128xf32>
    %186 = arith.negf %185 : vector<8x128xf32>
    %187 = math.exp %186 : vector<8x128xf32>
    %cst_48 = arith.constant 1.000000e+00 : f32
    %188 = vector.broadcast %cst_48 : f32 to vector<8x128xf32>
    %189 = arith.addf %188, %187 : vector<8x128xf32>
    %190 = arith.divf %188, %189 : vector<8x128xf32>
    %191 = vector.extract_strided_slice %170 {offsets = [0, 256], sizes = [8, 128], strides = [1, 1]} : vector<8x384xf32> to vector<8x128xf32>
    %192 = vector.extract_strided_slice %174 {offsets = [0, 256], sizes = [8, 128], strides = [1, 1]} : vector<8x384xf32> to vector<8x128xf32>
    %193 = arith.mulf %182, %192 : vector<8x128xf32>
    %194 = arith.addf %191, %193 : vector<8x128xf32>
    %195 = math.tanh %194 : vector<8x128xf32>
    %cst_49 = arith.constant 1.000000e+00 : f32
    %196 = vector.broadcast %cst_49 : f32 to vector<8x128xf32>
    %197 = arith.subf %196, %190 : vector<8x128xf32>
    %198 = arith.mulf %197, %195 : vector<8x128xf32>
    %199 = arith.mulf %190, %161 : vector<8x128xf32>
    %200 = arith.addf %198, %199 : vector<8x128xf32>
    %201 = arith.truncf %200 : vector<8x128xf32> to vector<8x128xbf16>
    %202 = arith.index_cast %c4_i32 : i32 to index
    %c0_50 = arith.constant 0 : index
    %c0_51 = arith.constant 0 : index
    %203 = vector.load %arg6[%202, %c0_50, %c0_51] : memref<8x8x128xbf16, #tpu.memory_space<vmem>>, vector<1x8x128xbf16>
    %204 = vector.shape_cast %203 : vector<1x8x128xbf16> to vector<8x128xbf16>
    %205 = vector.shape_cast %201 : vector<8x128xbf16> to vector<1x8x128xbf16>
    tpu.vector_store %arg6[%202, %c0_50, %c0_51], %205 {strides = array<i32>} : memref<8x8x128xbf16, #tpu.memory_space<vmem>>, vector<1x8x128xbf16>,
    %c5_i32 = arith.constant 5 : i32
    %c8_i32_52 = arith.constant 8 : i32
    %206 = arith.muli %c5_i32, %c8_i32_52 : i32
    %207 = tpu.assume_multiple %206, 8 : i32
    %208 = arith.index_cast %207 : i32 to index
    %c0_53 = arith.constant 0 : index
    %209 = vector.load %arg7[%208, %c0_53] : memref<64x384xf32, #tpu.memory_space<vmem>>, vector<8x384xf32>
    %210 = arith.truncf %200 : vector<8x128xf32> to vector<8x128xbf16>
    %cst_54 = arith.constant dense<0.000000e+00> : vector<8x384xf32>
    %211 = tpu.matmul %210, %8, %cst_54 {dimension_numbers = #tpu.dot_dimension_numbers<[1], [0], [0], [1], [0, 0, 1, 1], [], []>} : vector<8x128xbf16>, vector<128x384xbf16>, vector<8x384xf32> -> vector<8x384xf32>
    %212 = vector.broadcast %9 : vector<1x384xf32> to vector<8x384xf32>
    %213 = arith.addf %211, %212 : vector<8x384xf32>
    %214 = vector.extract_strided_slice %209 {offsets = [0, 0], sizes = [8, 128], strides = [1, 1]} : vector<8x384xf32> to vector<8x128xf32>
    %215 = vector.extract_strided_slice %213 {offsets = [0, 0], sizes = [8, 128], strides = [1, 1]} : vector<8x384xf32> to vector<8x128xf32>
    %216 = arith.addf %214, %215 : vector<8x128xf32>
    %217 = arith.negf %216 : vector<8x128xf32>
    %218 = math.exp %217 : vector<8x128xf32>
    %cst_55 = arith.constant 1.000000e+00 : f32
    %219 = vector.broadcast %cst_55 : f32 to vector<8x128xf32>
    %220 = arith.addf %219, %218 : vector<8x128xf32>
    %221 = arith.divf %219, %220 : vector<8x128xf32>
    %222 = vector.extract_strided_slice %209 {offsets = [0, 128], sizes = [8, 128], strides = [1, 1]} : vector<8x384xf32> to vector<8x128xf32>
    %223 = vector.extract_strided_slice %213 {offsets = [0, 128], sizes = [8, 128], strides = [1, 1]} : vector<8x384xf32> to vector<8x128xf32>
    %224 = arith.addf %222, %223 : vector<8x128xf32>
    %225 = arith.negf %224 : vector<8x128xf32>
    %226 = math.exp %225 : vector<8x128xf32>
    %cst_56 = arith.constant 1.000000e+00 : f32
    %227 = vector.broadcast %cst_56 : f32 to vector<8x128xf32>
    %228 = arith.addf %227, %226 : vector<8x128xf32>
    %229 = arith.divf %227, %228 : vector<8x128xf32>
    %230 = vector.extract_strided_slice %209 {offsets = [0, 256], sizes = [8, 128], strides = [1, 1]} : vector<8x384xf32> to vector<8x128xf32>
    %231 = vector.extract_strided_slice %213 {offsets = [0, 256], sizes = [8, 128], strides = [1, 1]} : vector<8x384xf32> to vector<8x128xf32>
    %232 = arith.mulf %221, %231 : vector<8x128xf32>
    %233 = arith.addf %230, %232 : vector<8x128xf32>
    %234 = math.tanh %233 : vector<8x128xf32>
    %cst_57 = arith.constant 1.000000e+00 : f32
    %235 = vector.broadcast %cst_57 : f32 to vector<8x128xf32>
    %236 = arith.subf %235, %229 : vector<8x128xf32>
    %237 = arith.mulf %236, %234 : vector<8x128xf32>
    %238 = arith.mulf %229, %200 : vector<8x128xf32>
    %239 = arith.addf %237, %238 : vector<8x128xf32>
    %240 = arith.truncf %239 : vector<8x128xf32> to vector<8x128xbf16>
    %241 = arith.index_cast %c5_i32 : i32 to index
    %c0_58 = arith.constant 0 : index
    %c0_59 = arith.constant 0 : index
    %242 = vector.load %arg6[%241, %c0_58, %c0_59] : memref<8x8x128xbf16, #tpu.memory_space<vmem>>, vector<1x8x128xbf16>
    %243 = vector.shape_cast %242 : vector<1x8x128xbf16> to vector<8x128xbf16>
    %244 = vector.shape_cast %240 : vector<8x128xbf16> to vector<1x8x128xbf16>
    tpu.vector_store %arg6[%241, %c0_58, %c0_59], %244 {strides = array<i32>} : memref<8x8x128xbf16, #tpu.memory_space<vmem>>, vector<1x8x128xbf16>,
    %c6_i32 = arith.constant 6 : i32
    %c8_i32_60 = arith.constant 8 : i32
    %245 = arith.muli %c6_i32, %c8_i32_60 : i32
    %246 = tpu.assume_multiple %245, 8 : i32
    %247 = arith.index_cast %246 : i32 to index
    %c0_61 = arith.constant 0 : index
    %248 = vector.load %arg7[%247, %c0_61] : memref<64x384xf32, #tpu.memory_space<vmem>>, vector<8x384xf32>
    %249 = arith.truncf %239 : vector<8x128xf32> to vector<8x128xbf16>
    %cst_62 = arith.constant dense<0.000000e+00> : vector<8x384xf32>
    %250 = tpu.matmul %249, %8, %cst_62 {dimension_numbers = #tpu.dot_dimension_numbers<[1], [0], [0], [1], [0, 0, 1, 1], [], []>} : vector<8x128xbf16>, vector<128x384xbf16>, vector<8x384xf32> -> vector<8x384xf32>
    %251 = vector.broadcast %9 : vector<1x384xf32> to vector<8x384xf32>
    %252 = arith.addf %250, %251 : vector<8x384xf32>
    %253 = vector.extract_strided_slice %248 {offsets = [0, 0], sizes = [8, 128], strides = [1, 1]} : vector<8x384xf32> to vector<8x128xf32>
    %254 = vector.extract_strided_slice %252 {offsets = [0, 0], sizes = [8, 128], strides = [1, 1]} : vector<8x384xf32> to vector<8x128xf32>
    %255 = arith.addf %253, %254 : vector<8x128xf32>
    %256 = arith.negf %255 : vector<8x128xf32>
    %257 = math.exp %256 : vector<8x128xf32>
    %cst_63 = arith.constant 1.000000e+00 : f32
    %258 = vector.broadcast %cst_63 : f32 to vector<8x128xf32>
    %259 = arith.addf %258, %257 : vector<8x128xf32>
    %260 = arith.divf %258, %259 : vector<8x128xf32>
    %261 = vector.extract_strided_slice %248 {offsets = [0, 128], sizes = [8, 128], strides = [1, 1]} : vector<8x384xf32> to vector<8x128xf32>
    %262 = vector.extract_strided_slice %252 {offsets = [0, 128], sizes = [8, 128], strides = [1, 1]} : vector<8x384xf32> to vector<8x128xf32>
    %263 = arith.addf %261, %262 : vector<8x128xf32>
    %264 = arith.negf %263 : vector<8x128xf32>
    %265 = math.exp %264 : vector<8x128xf32>
    %cst_64 = arith.constant 1.000000e+00 : f32
    %266 = vector.broadcast %cst_64 : f32 to vector<8x128xf32>
    %267 = arith.addf %266, %265 : vector<8x128xf32>
    %268 = arith.divf %266, %267 : vector<8x128xf32>
    %269 = vector.extract_strided_slice %248 {offsets = [0, 256], sizes = [8, 128], strides = [1, 1]} : vector<8x384xf32> to vector<8x128xf32>
    %270 = vector.extract_strided_slice %252 {offsets = [0, 256], sizes = [8, 128], strides = [1, 1]} : vector<8x384xf32> to vector<8x128xf32>
    %271 = arith.mulf %260, %270 : vector<8x128xf32>
    %272 = arith.addf %269, %271 : vector<8x128xf32>
    %273 = math.tanh %272 : vector<8x128xf32>
    %cst_65 = arith.constant 1.000000e+00 : f32
    %274 = vector.broadcast %cst_65 : f32 to vector<8x128xf32>
    %275 = arith.subf %274, %268 : vector<8x128xf32>
    %276 = arith.mulf %275, %273 : vector<8x128xf32>
    %277 = arith.mulf %268, %239 : vector<8x128xf32>
    %278 = arith.addf %276, %277 : vector<8x128xf32>
    %279 = arith.truncf %278 : vector<8x128xf32> to vector<8x128xbf16>
    %280 = arith.index_cast %c6_i32 : i32 to index
    %c0_66 = arith.constant 0 : index
    %c0_67 = arith.constant 0 : index
    %281 = vector.load %arg6[%280, %c0_66, %c0_67] : memref<8x8x128xbf16, #tpu.memory_space<vmem>>, vector<1x8x128xbf16>
    %282 = vector.shape_cast %281 : vector<1x8x128xbf16> to vector<8x128xbf16>
    %283 = vector.shape_cast %279 : vector<8x128xbf16> to vector<1x8x128xbf16>
    tpu.vector_store %arg6[%280, %c0_66, %c0_67], %283 {strides = array<i32>} : memref<8x8x128xbf16, #tpu.memory_space<vmem>>, vector<1x8x128xbf16>,
    %c7_i32 = arith.constant 7 : i32
    %c8_i32_68 = arith.constant 8 : i32
    %284 = arith.muli %c7_i32, %c8_i32_68 : i32
    %285 = tpu.assume_multiple %284, 8 : i32
    %286 = arith.index_cast %285 : i32 to index
    %c0_69 = arith.constant 0 : index
    %287 = vector.load %arg7[%286, %c0_69] : memref<64x384xf32, #tpu.memory_space<vmem>>, vector<8x384xf32>
    %288 = arith.truncf %278 : vector<8x128xf32> to vector<8x128xbf16>
    %cst_70 = arith.constant dense<0.000000e+00> : vector<8x384xf32>
    %289 = tpu.matmul %288, %8, %cst_70 {dimension_numbers = #tpu.dot_dimension_numbers<[1], [0], [0], [1], [0, 0, 1, 1], [], []>} : vector<8x128xbf16>, vector<128x384xbf16>, vector<8x384xf32> -> vector<8x384xf32>
    %290 = vector.broadcast %9 : vector<1x384xf32> to vector<8x384xf32>
    %291 = arith.addf %289, %290 : vector<8x384xf32>
    %292 = vector.extract_strided_slice %287 {offsets = [0, 0], sizes = [8, 128], strides = [1, 1]} : vector<8x384xf32> to vector<8x128xf32>
    %293 = vector.extract_strided_slice %291 {offsets = [0, 0], sizes = [8, 128], strides = [1, 1]} : vector<8x384xf32> to vector<8x128xf32>
    %294 = arith.addf %292, %293 : vector<8x128xf32>
    %295 = arith.negf %294 : vector<8x128xf32>
    %296 = math.exp %295 : vector<8x128xf32>
    %cst_71 = arith.constant 1.000000e+00 : f32
    %297 = vector.broadcast %cst_71 : f32 to vector<8x128xf32>
    %298 = arith.addf %297, %296 : vector<8x128xf32>
    %299 = arith.divf %297, %298 : vector<8x128xf32>
    %300 = vector.extract_strided_slice %287 {offsets = [0, 128], sizes = [8, 128], strides = [1, 1]} : vector<8x384xf32> to vector<8x128xf32>
    %301 = vector.extract_strided_slice %291 {offsets = [0, 128], sizes = [8, 128], strides = [1, 1]} : vector<8x384xf32> to vector<8x128xf32>
    %302 = arith.addf %300, %301 : vector<8x128xf32>
    %303 = arith.negf %302 : vector<8x128xf32>
    %304 = math.exp %303 : vector<8x128xf32>
    %cst_72 = arith.constant 1.000000e+00 : f32
    %305 = vector.broadcast %cst_72 : f32 to vector<8x128xf32>
    %306 = arith.addf %305, %304 : vector<8x128xf32>
    %307 = arith.divf %305, %306 : vector<8x128xf32>
    %308 = vector.extract_strided_slice %287 {offsets = [0, 256], sizes = [8, 128], strides = [1, 1]} : vector<8x384xf32> to vector<8x128xf32>
    %309 = vector.extract_strided_slice %291 {offsets = [0, 256], sizes = [8, 128], strides = [1, 1]} : vector<8x384xf32> to vector<8x128xf32>
    %310 = arith.mulf %299, %309 : vector<8x128xf32>
    %311 = arith.addf %308, %310 : vector<8x128xf32>
    %312 = math.tanh %311 : vector<8x128xf32>
    %cst_73 = arith.constant 1.000000e+00 : f32
    %313 = vector.broadcast %cst_73 : f32 to vector<8x128xf32>
    %314 = arith.subf %313, %307 : vector<8x128xf32>
    %315 = arith.mulf %314, %312 : vector<8x128xf32>
    %316 = arith.mulf %307, %278 : vector<8x128xf32>
    %317 = arith.addf %315, %316 : vector<8x128xf32>
    %318 = arith.truncf %317 : vector<8x128xf32> to vector<8x128xbf16>
    %319 = arith.index_cast %c7_i32 : i32 to index
    %c0_74 = arith.constant 0 : index
    %c0_75 = arith.constant 0 : index
    %320 = vector.load %arg6[%319, %c0_74, %c0_75] : memref<8x8x128xbf16, #tpu.memory_space<vmem>>, vector<1x8x128xbf16>
    %321 = vector.shape_cast %320 : vector<1x8x128xbf16> to vector<8x128xbf16>
    %322 = vector.shape_cast %318 : vector<8x128xbf16> to vector<1x8x128xbf16>
    tpu.vector_store %arg6[%319, %c0_74, %c0_75], %322 {strides = array<i32>} : memref<8x8x128xbf16, #tpu.memory_space<vmem>>, vector<1x8x128xbf16>,
    %c8_i32_76 = arith.constant 8 : i32
    return
  }
  func.func @transform_0(%arg0: i32) -> (i32, i32, i32) {
    %c0_i32 = arith.constant 0 : i32
    %c0_i32_0 = arith.constant 0 : i32
    %c0_i32_1 = arith.constant 0 : i32
    return %arg0, %c0_i32, %c0_i32_0 : i32, i32, i32
  }
  func.func @transform_1(%arg0: i32) -> (i32, i32) {
    %c0_i32 = arith.constant 0 : i32
    %c0_i32_0 = arith.constant 0 : i32
    %c0_i32_1 = arith.constant 0 : i32
    return %c0_i32, %c0_i32_0 : i32, i32
  }
  func.func @transform_2(%arg0: i32) -> (i32, i32) {
    %c0_i32 = arith.constant 0 : i32
    %c0_i32_0 = arith.constant 0 : i32
    %c0_i32_1 = arith.constant 0 : i32
    return %c0_i32, %c0_i32_0 : i32, i32
  }
  func.func @transform_3(%arg0: i32) -> (i32, i32) {
    %c0_i32 = arith.constant 0 : i32
    %c0_i32_0 = arith.constant 0 : i32
    %c0_i32_1 = arith.constant 0 : i32
    return %c0_i32, %c0_i32_0 : i32, i32
  }
  func.func @transform_4(%arg0: i32) -> (i32, i32) {
    %c0_i32 = arith.constant 0 : i32
    %c0_i32_0 = arith.constant 0 : i32
    %c0_i32_1 = arith.constant 0 : i32
    return %c0_i32, %c0_i32_0 : i32, i32
  }
  func.func @transform_5(%arg0: i32) -> (i32, i32, i32) {
    %c0_i32 = arith.constant 0 : i32
    %c0_i32_0 = arith.constant 0 : i32
    %c0_i32_1 = arith.constant 0 : i32
    return %c0_i32, %arg0, %c0_i32_0 : i32, i32, i32
  }
}

</mosaic_0001>

<llo_original>
// kernel: tpu_custom_call.1
$region0: #{tpu_custom_call.1}
  #allocation0 [shape = 'u32[]', space=smem, size = 0x4, offset = 0x4, fixed_abs, tag = 'smem constant byte address 0x4 - core index']
  #allocation1 [shape = 'u32[144,128]{1,0:T(1,128)}', space=vmem, size = 0x12000, scoped, tag = 'internal scratch']
  #allocation2 [shape = 'f32[64,384]{1,0:T(8,128)}', space=vmem, size = 0x18000, scoped, tag = 'scratch operand']
  %s0 = inlined_call_operand.vmem [shape: bf16[1,64,4], index: 0, kind: input, shape index: {}]
  %s1 = inlined_call_operand.vmem [shape: bf16[4,384], index: 1, kind: input, shape index: {}]
  %s2 = inlined_call_operand.hbm [shape: bf16[128,384], index: 2, kind: input, shape index: {}]
  %s3 = inlined_call_operand.vmem [shape: f32[1,384], index: 3, kind: input, shape index: {}]
  %s4 = inlined_call_operand.vmem [shape: f32[1,384], index: 4, kind: input, shape index: {}]
  %s5 = inlined_call_operand.hbm [shape: bf16[8,8,128], index: 5, kind: output, shape index: {}]
  %s6 = sld [smem:[#allocation0]]
  $region34: #{tpu_custom_call.1} parent=0
    _
  %s8 = ssub.s32 1, %s6
  %s9 = scalar_select 0, %s8, %s6
  $region1: #{tpu_custom_call.1} parent=0
    #allocation3 [shape = 'u8[98304]{0}', space=vmem, size = 0x18000, scoped, tag = 'input window, operand 2, single buffered']
    #allocation4 [shape = 's32[1]{0}', space=sflag, size = 0x4, scoped, tag = 'scoped memory for tpu_custom_call.1']
    #allocation5 [shape = 's32[1]{0}', space=sflag, size = 0x4, scoped, tag = 'scoped memory for tpu_custom_call.1']
    #allocation6 [shape = 'u8[16384]{0}', space=vmem, size = 0x4000, scoped, tag = 'output window, operand 0, single buffered']
    %10 = vsyncpa [#allocation4], 0
    %11 = vsyncpa [#allocation5], 0
    // Predicated region
    $region2: #{tpu_custom_call.1} parent=1 // pred_check
      _
    $region3: #{tpu_custom_call.1} parent=1 // pred_check_branch
      %13 = sbr.rel (0) target = $region5
    $region4: #{tpu_custom_call.1} parent=1 // pred_region
      _
    $region5: #{tpu_custom_call.1} parent=1 // pred_fallthru
      _
    // Predicated region
    $region6: #{tpu_custom_call.1} parent=1 // pred_check
      _
    $region7: #{tpu_custom_call.1} parent=1 // pred_check_branch
      %15 = sbr.rel (0) target = $region9
    $region8: #{tpu_custom_call.1} parent=1 // pred_region
      _
    $region9: #{tpu_custom_call.1} parent=1 // pred_fallthru
      _
    // Predicated region
    $region10: #{tpu_custom_call.1} parent=1 // pred_check
      _
    $region11: #{tpu_custom_call.1} parent=1 // pred_check_branch
      %17 = sbr.rel (0) target = $region13
    $region12: #{tpu_custom_call.1} parent=1 // pred_region
      %s19 = ssub.s32 3072, 3072
      %20 = vsyncadd [#allocation4], %s19
      %s21 = sshll.u32 [#allocation3], 4
      %s22 = int_to_ptr.vmem [resolvable:$true] %s21
      %27 = dma.hbm_to_vmem [thread:$0]  %s2, 3072, %s22, [#allocation4], 192, 192, 12
    $region13: #{tpu_custom_call.1} parent=1 // pred_fallthru
      _
    // Predicated region
    $region14: #{tpu_custom_call.1} parent=1 // pred_check
      _
    $region15: #{tpu_custom_call.1} parent=1 // pred_check_branch
      %29 = sbr.rel (0) target = $region17
    $region16: #{tpu_custom_call.1} parent=1 // pred_region
      _
    $region17: #{tpu_custom_call.1} parent=1 // pred_fallthru
      _
    // Predicated region
    $region18: #{tpu_custom_call.1} parent=1 // pred_check
      _
    $region19: #{tpu_custom_call.1} parent=1 // pred_check_branch
      %31 = sbr.rel (0) target = $region21
    $region20: #{tpu_custom_call.1} parent=1 // pred_region
      _
    $region21: #{tpu_custom_call.1} parent=1 // pred_fallthru
      _
    // Predicated region
    $region22: #{tpu_custom_call.1} parent=1 // pred_check
      _
    $region23: #{tpu_custom_call.1} parent=1 // pred_check_branch
      %33 = sbr.rel (0) target = $region25
    $region24: #{tpu_custom_call.1} parent=1 // pred_region
      %34 = dma.done [#allocation4], 3072
    $region25: #{tpu_custom_call.1} parent=1 // pred_fallthru
      _
    %v36 = vld [vmem:[%s0] sm:$0xf]
    %v37 = vld [vmem:[%s0 + $0x4] sm:$0xf]
    %v38 = vld [vmem:[%s0 + $0x8] sm:$0xf]
    %v39 = vld [vmem:[%s0 + $0xc] sm:$0xf]
    %v40 = vld [vmem:[%s0 + $0x10] sm:$0xf]
    %v41 = vld [vmem:[%s0 + $0x14] sm:$0xf]
    %v42 = vld [vmem:[%s0 + $0x18] sm:$0xf]
    %v43 = vld [vmem:[%s0 + $0x1c] sm:$0xf]
    %v44 = vld [vmem:[%s1] sm:$0x3f]
    %v45 = vld [vmem:[%s3] sm:$0x7]
    %v47 = vlaneseq
    %v48 = vshrl.u32 %v47, 7
    %v49 = vsub.s32 0, %v48
    %v50 = vrot.slane %v45, %v49
    %v51 = vlaneseq
    %v52 = vshrl.u32 %v51, 7
    %v53 = vsub.s32 1, %v52
    %v54 = vrot.slane %v45, %v53
    %v55 = vlaneseq
    %v56 = vshrl.u32 %v55, 7
    %v57 = vsub.s32 2, %v56
    %v58 = vrot.slane %v45, %v57
    %v70 = vunpack.c.l.b16 %v36
    %v71 = vunpack.c.l.b16 %v37
    %v72 = vunpack.c.l.b16 %v38
    %v73 = vunpack.c.l.b16 %v39
    %v74 = vunpack.c.l.b16 %v40
    %v75 = vunpack.c.l.b16 %v41
    %v76 = vunpack.c.l.b16 %v42
    %v77 = vunpack.c.l.b16 %v43
    %v78 = vpack.c.b16 %v71, %v70
    %v79 = vpack.c.b16 %v73, %v72
    %v80 = vpack.c.b16 %v75, %v74
    %v81 = vpack.c.b16 %v77, %v76
    %v83 = vcombine.high %v44, %v44
    %v85 = vunpack.c.l.s4 1983009808
    %v86 = vunpack.c.0.s8 %v85
    %v87 = vlaneseq
    %v88 = vshrl.u32 %v87, 7
    %v89 = vsub.s32 %v86, %v88
    %v90 = vrot.slane %v44, %v89
    %v92 = vunpack.c.l.s4 1983009808
    %v93 = vunpack.c.0.s8 %v92
    %v94 = vlaneseq
    %v95 = vshrl.u32 %v94, 7
    %v96 = vsub.s32 %v93, %v95
    %v97 = vrot.slane %v83, %v96
    %v98 = vcombine.high %v90, %v90
    %vm99 = vcmask 31744
    %v101 = vsel %vm99, %v78, 0
    %v104 = vsel %vm99, %v79, 0
    %v107 = vsel %vm99, %v80, 0
    %v110 = vsel %vm99, %v81, 0
    %vm112 = vcmask 1041408
    %v114 = vsel %vm112, %v90, 0
    %v117 = vsel %vm112, %v98, 0
    %v120 = vsel %vm112, %v97, 0
    %122 = vmatprep.subr.bf16.mxu0 0
    %123 = vmatpush1.bf16.msra.mxu0 0
    %124 = vmatprep.subr.bf16.mxu0 0
    %125 = vmatpush1.bf16.msra.mxu0 0
    %126 = vmatprep.subr.bf16.mxu0 0
    %127 = vmatpush1.bf16.msra.mxu0 0
    %128 = vmatprep.subr.bf16.mxu0 0
    %129 = vmatpush1.bf16.msra.mxu0 0
    %130 = vmatprep.subr.bf16.mxu0 0
    %131 = vmatpush1.bf16.msra.mxu0 0
    %132 = vmatprep.subr.bf16.mxu0 0
    %133 = vmatpush1.bf16.msra.mxu0 0
    %134 = vmatprep.subr.bf16.mxu0 0
    %135 = vmatpush1.bf16.msra.mxu0 0
    %136 = vmatprep.subr.bf16.mxu0 %v117
    %137 = vmatpush1.bf16.msra.mxu0 %v114
    %138 = vmatprep.subr.bf16.mxu0 0
    %139 = vmatpush2.bf16.msra.mxu0 0
    %140 = vmatprep.subr.bf16.mxu0 0
    %141 = vmatpush2.bf16.msra.mxu0 0
    %142 = vmatprep.subr.bf16.mxu0 0
    %143 = vmatpush2.bf16.msra.mxu0 0
    %144 = vmatprep.subr.bf16.mxu0 0
    %145 = vmatpush2.bf16.msra.mxu0 0
    %146 = vmatprep.subr.bf16.mxu0 0
    %147 = vmatpush2.bf16.msra.mxu0 0
    %148 = vmatprep.subr.bf16.mxu0 0
    %149 = vmatpush2.bf16.msra.mxu0 0
    %150 = vmatprep.subr.bf16.mxu0 0
    %151 = vmatpush2.bf16.msra.mxu0 0
    %152 = vmatprep.subr.bf16.mxu0 0
    %153 = vmatpush2.bf16.msra.mxu0 0
    %154 = vmatprep.mubr.bf16.mxu0 0
    %155 = vmatmul.mubr.bf16.gmra.mxu0 %v101
    %v156 = vpop.f32.mrf.mxu0
    %v157 = vadd.f32 %v50, %v156
    %v158 = vpop.f32.mrf.mxu0
    %v159 = vadd.f32 %v54, %v158
    %v160 = vpop.f32.mrf.mxu0
    %v161 = vadd.f32 %v50, %v160
    %v162 = vpop.f32.mrf.mxu0
    %v163 = vadd.f32 %v54, %v162
    %164 = vmatprep.mubr.bf16.mxu0 0
    %165 = vmatmul.mubr.bf16.gmra.mxu0 %v104
    %v166 = vpop.f32.mrf.mxu0
    %v167 = vadd.f32 %v50, %v166
    %v168 = vpop.f32.mrf.mxu0
    %v169 = vadd.f32 %v54, %v168
    %v170 = vpop.f32.mrf.mxu0
    %v171 = vadd.f32 %v50, %v170
    %v172 = vpop.f32.mrf.mxu0
    %v173 = vadd.f32 %v54, %v172
    %174 = vmatprep.mubr.bf16.mxu0 0
    %175 = vmatmul.mubr.bf16.gmra.mxu0 %v107
    %v176 = vpop.f32.mrf.mxu0
    %v177 = vadd.f32 %v50, %v176
    %v178 = vpop.f32.mrf.mxu0
    %v179 = vadd.f32 %v54, %v178
    %v180 = vpop.f32.mrf.mxu0
    %v181 = vadd.f32 %v50, %v180
    %v182 = vpop.f32.mrf.mxu0
    %v183 = vadd.f32 %v54, %v182
    %184 = vmatprep.mubr.bf16.mxu0 0
    %185 = vmatmul.mubr.bf16.gmra.mxu0 %v110
    %v186 = vpop.f32.mrf.mxu0
    %v187 = vadd.f32 %v50, %v186
    %v188 = vpop.f32.mrf.mxu0
    %v189 = vadd.f32 %v54, %v188
    %v190 = vpop.f32.mrf.mxu0
    %v191 = vadd.f32 %v50, %v190
    %v192 = vpop.f32.mrf.mxu0
    %v193 = vadd.f32 %v54, %v192
    %194 = vdwg.mxu0
    %195 = vmatprep.subr.bf16.mxu0 0
    %196 = vmatpush1.bf16.msra.mxu0 0
    %197 = vmatprep.subr.bf16.mxu0 0
    %198 = vmatpush1.bf16.msra.mxu0 0
    %199 = vmatprep.subr.bf16.mxu0 0
    %200 = vmatpush1.bf16.msra.mxu0 0
    %201 = vmatprep.subr.bf16.mxu0 0
    %202 = vmatpush1.bf16.msra.mxu0 0
    %203 = vmatprep.subr.bf16.mxu0 0
    %204 = vmatpush1.bf16.msra.mxu0 0
    %205 = vmatprep.subr.bf16.mxu0 0
    %206 = vmatpush1.bf16.msra.mxu0 0
    %207 = vmatprep.subr.bf16.mxu0 0
    %208 = vmatpush1.bf16.msra.mxu0 0
    %209 = vmatprep.subr.bf16.mxu0 0
    %210 = vmatpush1.bf16.msra.mxu0 %v120
    %211 = vmatprep.subr.bf16.mxu0 0
    %212 = vmatpush2.bf16.msra.mxu0 0
    %213 = vmatprep.subr.bf16.mxu0 0
    %214 = vmatpush2.bf16.msra.mxu0 0
    %215 = vmatprep.subr.bf16.mxu0 0
    %216 = vmatpush2.bf16.msra.mxu0 0
    %217 = vmatprep.subr.bf16.mxu0 0
    %218 = vmatpush2.bf16.msra.mxu0 0
    %219 = vmatprep.subr.bf16.mxu0 0
    %220 = vmatpush2.bf16.msra.mxu0 0
    %221 = vmatprep.subr.bf16.mxu0 0
    %222 = vmatpush2.bf16.msra.mxu0 0
    %223 = vmatprep.subr.bf16.mxu0 0
    %224 = vmatpush2.bf16.msra.mxu0 0
    %225 = vmatprep.subr.bf16.mxu0 0
    %226 = vmatpush2.bf16.msra.mxu0 0
    %227 = vmatprep.mubr.bf16.mxu0 0
    %228 = vmatmul.mubr.bf16.gmra.mxu0 %v101
    %v229 = vpop.f32.mrf.mxu0
    %v230 = vadd.f32 %v58, %v229
    %v231 = vpop.f32.mrf.mxu0
    %v232 = vpop.f32.mrf.mxu0
    %v233 = vadd.f32 %v58, %v232
    %v234 = vpop.f32.mrf.mxu0
    %235 = vmatprep.mubr.bf16.mxu0 0
    %236 = vmatmul.mubr.bf16.gmra.mxu0 %v104
    %v237 = vpop.f32.mrf.mxu0
    %v238 = vadd.f32 %v58, %v237
    %v239 = vpop.f32.mrf.mxu0
    %v240 = vpop.f32.mrf.mxu0
    %v241 = vadd.f32 %v58, %v240
    %v242 = vpop.f32.mrf.mxu0
    %243 = vmatprep.mubr.bf16.mxu0 0
    %244 = vmatmul.mubr.bf16.gmra.mxu0 %v107
    %v245 = vpop.f32.mrf.mxu0
    %v246 = vadd.f32 %v58, %v245
    %v247 = vpop.f32.mrf.mxu0
    %v248 = vpop.f32.mrf.mxu0
    %v249 = vadd.f32 %v58, %v248
    %v250 = vpop.f32.mrf.mxu0
    %251 = vmatprep.mubr.bf16.mxu0 0
    %252 = vmatmul.mubr.bf16.gmra.mxu0 %v110
    %v253 = vpop.f32.mrf.mxu0
    %v254 = vadd.f32 %v58, %v253
    %v255 = vpop.f32.mrf.mxu0
    %v256 = vpop.f32.mrf.mxu0
    %v257 = vadd.f32 %v58, %v256
    %v258 = vpop.f32.mrf.mxu0
    %259 = vdwg.mxu0
    %260 = vst [vmem:[#allocation2] sm:$0xff] %v157
    %261 = vst [vmem:[#allocation2 + $0x8] sm:$0xff] %v159
    %262 = vst [vmem:[#allocation2 + $0x10] sm:$0xff] %v230
    %263 = vst [vmem:[#allocation2 + $0x18] sm:$0xff] %v161
    %264 = vst [vmem:[#allocation2 + $0x20] sm:$0xff] %v163
    %265 = vst [vmem:[#allocation2 + $0x28] sm:$0xff] %v233
    %266 = vst [vmem:[#allocation2 + $0x30] sm:$0xff] %v167
    %267 = vst [vmem:[#allocation2 + $0x38] sm:$0xff] %v169
    %268 = vst [vmem:[#allocation2 + $0x40] sm:$0xff] %v238
    %269 = vst [vmem:[#allocation2 + $0x48] sm:$0xff] %v171
    %270 = vst [vmem:[#allocation2 + $0x50] sm:$0xff] %v173
    %271 = vst [vmem:[#allocation2 + $0x58] sm:$0xff] %v241
    %272 = vst [vmem:[#allocation2 + $0x60] sm:$0xff] %v177
    %273 = vst [vmem:[#allocation2 + $0x68] sm:$0xff] %v179
    %274 = vst [vmem:[#allocation2 + $0x70] sm:$0xff] %v246
    %275 = vst [vmem:[#allocation2 + $0x78] sm:$0xff] %v181
    %276 = vst [vmem:[#allocation2 + $0x80] sm:$0xff] %v183
    %277 = vst [vmem:[#allocation2 + $0x88] sm:$0xff] %v249
    %278 = vst [vmem:[#allocation2 + $0x90] sm:$0xff] %v187
    %279 = vst [vmem:[#allocation2 + $0x98] sm:$0xff] %v189
    %280 = vst [vmem:[#allocation2 + $0xa0] sm:$0xff] %v254
    %281 = vst [vmem:[#allocation2 + $0xa8] sm:$0xff] %v191
    %282 = vst [vmem:[#allocation2 + $0xb0] sm:$0xff] %v193
    %283 = vst [vmem:[#allocation2 + $0xb8] sm:$0xff] %v257
    %v284 = vld [vmem:[#allocation3] sm:$0xff]
    %v285 = vld [vmem:[#allocation3 + $0x8] sm:$0xf]
    %v286 = vld [vmem:[#allocation3 + $0xc] sm:$0xff]
    %v287 = vld [vmem:[#allocation3 + $0x14] sm:$0xf]
    %v288 = vld [vmem:[#allocation3 + $0x18] sm:$0xff]
    %v289 = vld [vmem:[#allocation3 + $0x20] sm:$0xf]
    %v290 = vld [vmem:[#allocation3 + $0x24] sm:$0xff]
    %v291 = vld [vmem:[#allocation3 + $0x2c] sm:$0xf]
    %v292 = vld [vmem:[#allocation3 + $0x30] sm:$0xff]
    %v293 = vld [vmem:[#allocation3 + $0x38] sm:$0xf]
    %v294 = vld [vmem:[#allocation3 + $0x3c] sm:$0xff]
    %v295 = vld [vmem:[#allocation3 + $0x44] sm:$0xf]
    %v296 = vld [vmem:[#allocation3 + $0x48] sm:$0xff]
    %v297 = vld [vmem:[#allocation3 + $0x50] sm:$0xf]
    %v298 = vld [vmem:[#allocation3 + $0x54] sm:$0xff]
    %v299 = vld [vmem:[#allocation3 + $0x5c] sm:$0xf]
    %v300 = vld [vmem:[#allocation3 + $0x60] sm:$0xff]
    %v301 = vld [vmem:[#allocation3 + $0x68] sm:$0xf]
    %v302 = vld [vmem:[#allocation3 + $0x6c] sm:$0xff]
    %v303 = vld [vmem:[#allocation3 + $0x74] sm:$0xf]
    %v304 = vld [vmem:[#allocation3 + $0x78] sm:$0xff]
    %v305 = vld [vmem:[#allocation3 + $0x80] sm:$0xf]
    %v306 = vld [vmem:[#allocation3 + $0x84] sm:$0xff]
    %v307 = vld [vmem:[#allocation3 + $0x8c] sm:$0xf]
    %v308 = vld [vmem:[#allocation3 + $0x90] sm:$0xff]
    %v309 = vld [vmem:[#allocation3 + $0x98] sm:$0xf]
    %v310 = vld [vmem:[#allocation3 + $0x9c] sm:$0xff]
    %v311 = vld [vmem:[#allocation3 + $0xa4] sm:$0xf]
    %v312 = vld [vmem:[#allocation3 + $0xa8] sm:$0xff]
    %v313 = vld [vmem:[#allocation3 + $0xb0] sm:$0xf]
    %v314 = vld [vmem:[#allocation3 + $0xb4] sm:$0xff]
    %v315 = vld [vmem:[#allocation3 + $0xbc] sm:$0xf]
    %v316 = vld [vmem:[%s4] sm:$0x7]
    %s317 = smul.u32 0, 3
    %s318 = smul.addr %s317, 8
    %s319 = scalar_lea.vmem [#allocation2], %s318
    %v320 = vld [vmem:[%s319] sm:$0xff]
    %v321 = vld [vmem:[%s319 + $0x8] sm:$0xff]
    %v322 = vld [vmem:[%s319 + $0x10] sm:$0xff]
    %v324 = vlaneseq
    %v325 = vshrl.u32 %v324, 7
    %v326 = vsub.s32 0, %v325
    %v327 = vrot.slane %v316, %v326
    %v328 = vlaneseq
    %v329 = vshrl.u32 %v328, 7
    %v330 = vsub.s32 1, %v329
    %v331 = vrot.slane %v316, %v330
    %v332 = vlaneseq
    %v333 = vshrl.u32 %v332, 7
    %v334 = vsub.s32 2, %v333
    %v335 = vrot.slane %v316, %v334
    %v371 = vunpack.c.l.b16 %v284
    %v372 = vunpack.c.h.b16 %v284
    %v373 = vunpack.c.l.b16 %v285
    %v374 = vunpack.c.l.b16 %v286
    %v375 = vunpack.c.h.b16 %v286
    %v376 = vunpack.c.l.b16 %v287
    %v377 = vunpack.c.l.b16 %v288
    %v378 = vunpack.c.h.b16 %v288
    %v379 = vunpack.c.l.b16 %v289
    %v380 = vunpack.c.l.b16 %v290
    %v381 = vunpack.c.h.b16 %v290
    %v382 = vunpack.c.l.b16 %v291
    %v383 = vunpack.c.l.b16 %v292
    %v384 = vunpack.c.h.b16 %v292
    %v385 = vunpack.c.l.b16 %v293
    %v386 = vunpack.c.l.b16 %v294
    %v387 = vunpack.c.h.b16 %v294
    %v388 = vunpack.c.l.b16 %v295
    %v389 = vunpack.c.l.b16 %v296
    %v390 = vunpack.c.h.b16 %v296
    %v391 = vunpack.c.l.b16 %v297
    %v392 = vunpack.c.l.b16 %v298
    %v393 = vunpack.c.h.b16 %v298
    %v394 = vunpack.c.l.b16 %v299
    %v395 = vunpack.c.l.b16 %v300
    %v396 = vunpack.c.h.b16 %v300
    %v397 = vunpack.c.l.b16 %v301
    %v398 = vunpack.c.l.b16 %v302
    %v399 = vunpack.c.h.b16 %v302
    %v400 = vunpack.c.l.b16 %v303
    %v401 = vunpack.c.l.b16 %v304
    %v402 = vunpack.c.h.b16 %v304
    %v403 = vunpack.c.l.b16 %v305
    %v404 = vunpack.c.l.b16 %v306
    %v405 = vunpack.c.h.b16 %v306
    %v406 = vunpack.c.l.b16 %v307
    %v407 = vunpack.c.l.b16 %v308
    %v408 = vunpack.c.h.b16 %v308
    %v409 = vunpack.c.l.b16 %v309
    %v410 = vunpack.c.l.b16 %v310
    %v411 = vunpack.c.h.b16 %v310
    %v412 = vunpack.c.l.b16 %v311
    %v413 = vunpack.c.l.b16 %v312
    %v414 = vunpack.c.h.b16 %v312
    %v415 = vunpack.c.l.b16 %v313
    %v416 = vunpack.c.l.b16 %v314
    %v417 = vunpack.c.h.b16 %v314
    %v418 = vunpack.c.l.b16 %v315
    %v419 = vpack.c.b16 %v374, %v371
    %v420 = vpack.c.b16 %v375, %v372
    %v421 = vpack.c.b16 %v376, %v373
    %v422 = vpack.c.b16 %v380, %v377
    %v423 = vpack.c.b16 %v381, %v378
    %v424 = vpack.c.b16 %v382, %v379
    %v425 = vpack.c.b16 %v386, %v383
    %v426 = vpack.c.b16 %v387, %v384
    %v427 = vpack.c.b16 %v388, %v385
    %v428 = vpack.c.b16 %v392, %v389
    %v429 = vpack.c.b16 %v393, %v390
    %v430 = vpack.c.b16 %v394, %v391
    %v431 = vpack.c.b16 %v398, %v395
    %v432 = vpack.c.b16 %v399, %v396
    %v433 = vpack.c.b16 %v400, %v397
    %v434 = vpack.c.b16 %v404, %v401
    %v435 = vpack.c.b16 %v405, %v402
    %v436 = vpack.c.b16 %v406, %v403
    %v437 = vpack.c.b16 %v410, %v407
    %v438 = vpack.c.b16 %v411, %v408
    %v439 = vpack.c.b16 %v412, %v409
    %v440 = vpack.c.b16 %v416, %v413
    %v441 = vpack.c.b16 %v417, %v414
    %v442 = vpack.c.b16 %v418, %v415
    %467 = vmatprep.subr.bf16.mxu0 %v441
    %468 = vmatpush1.bf16.msra.mxu0 %v440
    %469 = vmatprep.subr.bf16.mxu0 %v438
    %470 = vmatpush1.bf16.msra.mxu0 %v437
    %471 = vmatprep.subr.bf16.mxu0 %v435
    %472 = vmatpush1.bf16.msra.mxu0 %v434
    %473 = vmatprep.subr.bf16.mxu0 %v432
    %474 = vmatpush1.bf16.msra.mxu0 %v431
    %475 = vmatprep.subr.bf16.mxu0 %v429
    %476 = vmatpush1.bf16.msra.mxu0 %v428
    %477 = vmatprep.subr.bf16.mxu0 %v426
    %478 = vmatpush1.bf16.msra.mxu0 %v425
    %479 = vmatprep.subr.bf16.mxu0 %v423
    %480 = vmatpush1.bf16.msra.mxu0 %v422
    %481 = vmatprep.subr.bf16.mxu0 %v420
    %482 = vmatpush1.bf16.msra.mxu0 %v419
    %483 = vmatprep.subr.bf16.mxu0 0
    %484 = vmatpush2.bf16.msra.mxu0 0
    %485 = vmatprep.subr.bf16.mxu0 0
    %486 = vmatpush2.bf16.msra.mxu0 0
    %487 = vmatprep.subr.bf16.mxu0 0
    %488 = vmatpush2.bf16.msra.mxu0 0
    %489 = vmatprep.subr.bf16.mxu0 0
    %490 = vmatpush2.bf16.msra.mxu0 0
    %491 = vmatprep.subr.bf16.mxu0 0
    %492 = vmatpush2.bf16.msra.mxu0 0
    %493 = vmatprep.subr.bf16.mxu0 0
    %494 = vmatpush2.bf16.msra.mxu0 0
    %495 = vmatprep.subr.bf16.mxu0 0
    %496 = vmatpush2.bf16.msra.mxu0 0
    %497 = vmatprep.subr.bf16.mxu0 0
    %498 = vmatpush2.bf16.msra.mxu0 0
    %499 = vmatprep.mubr.bf16.mxu0 0
    %500 = vmatmul.mubr.bf16.gmra.mxu0 0
    %v501 = vpop.f32.mrf.mxu0
    %v502 = vadd.f32 %v327, %v501
    %v503 = vpop.f32.mrf.mxu0
    %v504 = vadd.f32 %v331, %v503
    %v505 = vpop.f32.mrf.mxu0
    %v506 = vpop.f32.mrf.mxu0
    %507 = vdwg.mxu0
    %508 = vmatprep.subr.bf16.mxu0 0
    %509 = vmatpush1.bf16.msra.mxu0 %v442
    %510 = vmatprep.subr.bf16.mxu0 0
    %511 = vmatpush1.bf16.msra.mxu0 %v439
    %512 = vmatprep.subr.bf16.mxu0 0
    %513 = vmatpush1.bf16.msra.mxu0 %v436
    %514 = vmatprep.subr.bf16.mxu0 0
    %515 = vmatpush1.bf16.msra.mxu0 %v433
    %516 = vmatprep.subr.bf16.mxu0 0
    %517 = vmatpush1.bf16.msra.mxu0 %v430
    %518 = vmatprep.subr.bf16.mxu0 0
    %519 = vmatpush1.bf16.msra.mxu0 %v427
    %520 = vmatprep.subr.bf16.mxu0 0
    %521 = vmatpush1.bf16.msra.mxu0 %v424
    %522 = vmatprep.subr.bf16.mxu0 0
    %523 = vmatpush1.bf16.msra.mxu0 %v421
    %524 = vmatprep.subr.bf16.mxu0 0
    %525 = vmatpush2.bf16.msra.mxu0 0
    %526 = vmatprep.subr.bf16.mxu0 0
    %527 = vmatpush2.bf16.msra.mxu0 0
    %528 = vmatprep.subr.bf16.mxu0 0
    %529 = vmatpush2.bf16.msra.mxu0 0
    %530 = vmatprep.subr.bf16.mxu0 0
    %531 = vmatpush2.bf16.msra.mxu0 0
    %532 = vmatprep.subr.bf16.mxu0 0
    %533 = vmatpush2.bf16.msra.mxu0 0
    %534 = vmatprep.subr.bf16.mxu0 0
    %535 = vmatpush2.bf16.msra.mxu0 0
    %536 = vmatprep.subr.bf16.mxu0 0
    %537 = vmatpush2.bf16.msra.mxu0 0
    %538 = vmatprep.subr.bf16.mxu0 0
    %539 = vmatpush2.bf16.msra.mxu0 0
    %540 = vmatprep.mubr.bf16.mxu0 0
    %541 = vmatmul.mubr.bf16.gmra.mxu0 0
    %v542 = vpop.f32.mrf.mxu0
    %v543 = vadd.f32 %v335, %v542
    %v544 = vpop.f32.mrf.mxu0
    %v545 = vpop.f32.mrf.mxu0
    %v546 = vpop.f32.mrf.mxu0
    %547 = vdwg.mxu0
    %v548 = vadd.f32 %v320, %v502
    %v549 = vxor.u32 %v548, 2147483648
    %v550 = vmul.f32 %v549, 1.442695
    %v551 = vpow.pop %v550
    %v552 = vadd.f32 %v551, 1.0
    %v553 = vrcp.pop %v552
    %v554 = vmul.f32 1.0, %v553
    %v555 = vadd.f32 %v321, %v504
    %v556 = vxor.u32 %v555, 2147483648
    %v557 = vmul.f32 %v556, 1.442695
    %v558 = vpow.pop %v557
    %v559 = vadd.f32 %v558, 1.0
    %v560 = vrcp.pop %v559
    %v561 = vmul.f32 1.0, %v560
    %v562 = vmul.f32 %v554, %v543
    %v563 = vadd.f32 %v322, %v562
    %v564 = vtanh.pop %v563
    %v565 = vsub.f32 1.0, %v561
    %v566 = vmul.f32 %v565, %v564
    %v567 = vmul.f32 %v561, 0.0
    %v568 = vadd.f32 %v566, %v567
    %v569 = vpack.c.bf16 %v568, %v568
    %570 = vst [vmem:[#allocation6] sm:$0xf] %v569
    %s571 = smul.u32 1, 3
    %s572 = smul.addr %s571, 8
    %s573 = scalar_lea.vmem [#allocation2], %s572
    %v574 = vld [vmem:[%s573] sm:$0xff]
    %v575 = vld [vmem:[%s573 + $0x8] sm:$0xff]
    %v576 = vld [vmem:[%s573 + $0x10] sm:$0xff]
    %577 = vmatprep.subr.bf16.mxu0 %v441
    %578 = vmatpush1.bf16.msra.mxu0 %v440
    %579 = vmatprep.subr.bf16.mxu0 %v438
    %580 = vmatpush1.bf16.msra.mxu0 %v437
    %581 = vmatprep.subr.bf16.mxu0 %v435
    %582 = vmatpush1.bf16.msra.mxu0 %v434
    %583 = vmatprep.subr.bf16.mxu0 %v432
    %584 = vmatpush1.bf16.msra.mxu0 %v431
    %585 = vmatprep.subr.bf16.mxu0 %v429
    %586 = vmatpush1.bf16.msra.mxu0 %v428
    %587 = vmatprep.subr.bf16.mxu0 %v426
    %588 = vmatpush1.bf16.msra.mxu0 %v425
    %589 = vmatprep.subr.bf16.mxu0 %v423
    %590 = vmatpush1.bf16.msra.mxu0 %v422
    %591 = vmatprep.subr.bf16.mxu0 %v420
    %592 = vmatpush1.bf16.msra.mxu0 %v419
    %593 = vmatprep.subr.bf16.mxu0 0
    %594 = vmatpush2.bf16.msra.mxu0 0
    %595 = vmatprep.subr.bf16.mxu0 0
    %596 = vmatpush2.bf16.msra.mxu0 0
    %597 = vmatprep.subr.bf16.mxu0 0
    %598 = vmatpush2.bf16.msra.mxu0 0
    %599 = vmatprep.subr.bf16.mxu0 0
    %600 = vmatpush2.bf16.msra.mxu0 0
    %601 = vmatprep.subr.bf16.mxu0 0
    %602 = vmatpush2.bf16.msra.mxu0 0
    %603 = vmatprep.subr.bf16.mxu0 0
    %604 = vmatpush2.bf16.msra.mxu0 0
    %605 = vmatprep.subr.bf16.mxu0 0
    %606 = vmatpush2.bf16.msra.mxu0 0
    %607 = vmatprep.subr.bf16.mxu0 0
    %608 = vmatpush2.bf16.msra.mxu0 0
    %609 = vmatprep.mubr.bf16.mxu0 0
    %610 = vmatmul.mubr.bf16.gmra.mxu0 %v569
    %v611 = vpop.f32.mrf.mxu0
    %v612 = vadd.f32 %v327, %v611
    %v613 = vpop.f32.mrf.mxu0
    %v614 = vadd.f32 %v331, %v613
    %v615 = vpop.f32.mrf.mxu0
    %v616 = vpop.f32.mrf.mxu0
    %617 = vdwg.mxu0
    %618 = vmatprep.subr.bf16.mxu0 0
    %619 = vmatpush1.bf16.msra.mxu0 %v442
    %620 = vmatprep.subr.bf16.mxu0 0
    %621 = vmatpush1.bf16.msra.mxu0 %v439
    %622 = vmatprep.subr.bf16.mxu0 0
    %623 = vmatpush1.bf16.msra.mxu0 %v436
    %624 = vmatprep.subr.bf16.mxu0 0
    %625 = vmatpush1.bf16.msra.mxu0 %v433
    %626 = vmatprep.subr.bf16.mxu0 0
    %627 = vmatpush1.bf16.msra.mxu0 %v430
    %628 = vmatprep.subr.bf16.mxu0 0
    %629 = vmatpush1.bf16.msra.mxu0 %v427
    %630 = vmatprep.subr.bf16.mxu0 0
    %631 = vmatpush1.bf16.msra.mxu0 %v424
    %632 = vmatprep.subr.bf16.mxu0 0
    %633 = vmatpush1.bf16.msra.mxu0 %v421
    %634 = vmatprep.subr.bf16.mxu0 0
    %635 = vmatpush2.bf16.msra.mxu0 0
    %636 = vmatprep.subr.bf16.mxu0 0
    %637 = vmatpush2.bf16.msra.mxu0 0
    %638 = vmatprep.subr.bf16.mxu0 0
    %639 = vmatpush2.bf16.msra.mxu0 0
    %640 = vmatprep.subr.bf16.mxu0 0
    %641 = vmatpush2.bf16.msra.mxu0 0
    %642 = vmatprep.subr.bf16.mxu0 0
    %643 = vmatpush2.bf16.msra.mxu0 0
    %644 = vmatprep.subr.bf16.mxu0 0
    %645 = vmatpush2.bf16.msra.mxu0 0
    %646 = vmatprep.subr.bf16.mxu0 0
    %647 = vmatpush2.bf16.msra.mxu0 0
    %648 = vmatprep.subr.bf16.mxu0 0
    %649 = vmatpush2.bf16.msra.mxu0 0
    %650 = vmatprep.mubr.bf16.mxu0 0
    %651 = vmatmul.mubr.bf16.gmra.mxu0 %v569
    %v652 = vpop.f32.mrf.mxu0
    %v653 = vadd.f32 %v335, %v652
    %v654 = vpop.f32.mrf.mxu0
    %v655 = vpop.f32.mrf.mxu0
    %v656 = vpop.f32.mrf.mxu0
    %657 = vdwg.mxu0
    %v658 = vadd.f32 %v574, %v612
    %v659 = vxor.u32 %v658, 2147483648
    %v660 = vmul.f32 %v659, 1.442695
    %v661 = vpow.pop %v660
    %v662 = vadd.f32 %v661, 1.0
    %v663 = vrcp.pop %v662
    %v664 = vmul.f32 1.0, %v663
    %v665 = vadd.f32 %v575, %v614
    %v666 = vxor.u32 %v665, 2147483648
    %v667 = vmul.f32 %v666, 1.442695
    %v668 = vpow.pop %v667
    %v669 = vadd.f32 %v668, 1.0
    %v670 = vrcp.pop %v669
    %v671 = vmul.f32 1.0, %v670
    %v672 = vmul.f32 %v664, %v653
    %v673 = vadd.f32 %v576, %v672
    %v674 = vtanh.pop %v673
    %v675 = vsub.f32 1.0, %v671
    %v676 = vmul.f32 %v675, %v674
    %v677 = vmul.f32 %v671, %v568
    %v678 = vadd.f32 %v676, %v677
    %v679 = vpack.c.bf16 %v678, %v678
    %s680 = scalar_lea.vmem [#allocation6], 4
    %681 = vst [vmem:[%s680] sm:$0xf] %v679
    %s682 = smul.u32 2, 3
    %s683 = smul.addr %s682, 8
    %s684 = scalar_lea.vmem [#allocation2], %s683
    %v685 = vld [vmem:[%s684] sm:$0xff]
    %v686 = vld [vmem:[%s684 + $0x8] sm:$0xff]
    %v687 = vld [vmem:[%s684 + $0x10] sm:$0xff]
    %688 = vmatprep.subr.bf16.mxu0 %v441
    %689 = vmatpush1.bf16.msra.mxu0 %v440
    %690 = vmatprep.subr.bf16.mxu0 %v438
    %691 = vmatpush1.bf16.msra.mxu0 %v437
    %692 = vmatprep.subr.bf16.mxu0 %v435
    %693 = vmatpush1.bf16.msra.mxu0 %v434
    %694 = vmatprep.subr.bf16.mxu0 %v432
    %695 = vmatpush1.bf16.msra.mxu0 %v431
    %696 = vmatprep.subr.bf16.mxu0 %v429
    %697 = vmatpush1.bf16.msra.mxu0 %v428
    %698 = vmatprep.subr.bf16.mxu0 %v426
    %699 = vmatpush1.bf16.msra.mxu0 %v425
    %700 = vmatprep.subr.bf16.mxu0 %v423
    %701 = vmatpush1.bf16.msra.mxu0 %v422
    %702 = vmatprep.subr.bf16.mxu0 %v420
    %703 = vmatpush1.bf16.msra.mxu0 %v419
    %704 = vmatprep.subr.bf16.mxu0 0
    %705 = vmatpush2.bf16.msra.mxu0 0
    %706 = vmatprep.subr.bf16.mxu0 0
    %707 = vmatpush2.bf16.msra.mxu0 0
    %708 = vmatprep.subr.bf16.mxu0 0
    %709 = vmatpush2.bf16.msra.mxu0 0
    %710 = vmatprep.subr.bf16.mxu0 0
    %711 = vmatpush2.bf16.msra.mxu0 0
    %712 = vmatprep.subr.bf16.mxu0 0
    %713 = vmatpush2.bf16.msra.mxu0 0
    %714 = vmatprep.subr.bf16.mxu0 0
    %715 = vmatpush2.bf16.msra.mxu0 0
    %716 = vmatprep.subr.bf16.mxu0 0
    %717 = vmatpush2.bf16.msra.mxu0 0
    %718 = vmatprep.subr.bf16.mxu0 0
    %719 = vmatpush2.bf16.msra.mxu0 0
    %720 = vmatprep.mubr.bf16.mxu0 0
    %721 = vmatmul.mubr.bf16.gmra.mxu0 %v679
    %v722 = vpop.f32.mrf.mxu0
    %v723 = vadd.f32 %v327, %v722
    %v724 = vpop.f32.mrf.mxu0
    %v725 = vadd.f32 %v331, %v724
    %v726 = vpop.f32.mrf.mxu0
    %v727 = vpop.f32.mrf.mxu0
    %728 = vdwg.mxu0
    %729 = vmatprep.subr.bf16.mxu0 0
    %730 = vmatpush1.bf16.msra.mxu0 %v442
    %731 = vmatprep.subr.bf16.mxu0 0
    %732 = vmatpush1.bf16.msra.mxu0 %v439
    %733 = vmatprep.subr.bf16.mxu0 0
    %734 = vmatpush1.bf16.msra.mxu0 %v436
    %735 = vmatprep.subr.bf16.mxu0 0
    %736 = vmatpush1.bf16.msra.mxu0 %v433
    %737 = vmatprep.subr.bf16.mxu0 0
    %738 = vmatpush1.bf16.msra.mxu0 %v430
    %739 = vmatprep.subr.bf16.mxu0 0
    %740 = vmatpush1.bf16.msra.mxu0 %v427
    %741 = vmatprep.subr.bf16.mxu0 0
    %742 = vmatpush1.bf16.msra.mxu0 %v424
    %743 = vmatprep.subr.bf16.mxu0 0
    %744 = vmatpush1.bf16.msra.mxu0 %v421
    %745 = vmatprep.subr.bf16.mxu0 0
    %746 = vmatpush2.bf16.msra.mxu0 0
    %747 = vmatprep.subr.bf16.mxu0 0
    %748 = vmatpush2.bf16.msra.mxu0 0
    %749 = vmatprep.subr.bf16.mxu0 0
    %750 = vmatpush2.bf16.msra.mxu0 0
    %751 = vmatprep.subr.bf16.mxu0 0
    %752 = vmatpush2.bf16.msra.mxu0 0
    %753 = vmatprep.subr.bf16.mxu0 0
    %754 = vmatpush2.bf16.msra.mxu0 0
    %755 = vmatprep.subr.bf16.mxu0 0
    %756 = vmatpush2.bf16.msra.mxu0 0
    %757 = vmatprep.subr.bf16.mxu0 0
    %758 = vmatpush2.bf16.msra.mxu0 0
    %759 = vmatprep.subr.bf16.mxu0 0
    %760 = vmatpush2.bf16.msra.mxu0 0
    %761 = vmatprep.mubr.bf16.mxu0 0
    %762 = vmatmul.mubr.bf16.gmra.mxu0 %v679
    %v763 = vpop.f32.mrf.mxu0
    %v764 = vadd.f32 %v335, %v763
    %v765 = vpop.f32.mrf.mxu0
    %v766 = vpop.f32.mrf.mxu0
    %v767 = vpop.f32.mrf.mxu0
    %768 = vdwg.mxu0
    %v769 = vadd.f32 %v685, %v723
    %v770 = vxor.u32 %v769, 2147483648
    %v771 = vmul.f32 %v770, 1.442695
    %v772 = vpow.pop %v771
    %v773 = vadd.f32 %v772, 1.0
    %v774 = vrcp.pop %v773
    %v775 = vmul.f32 1.0, %v774
    %v776 = vadd.f32 %v686, %v725
    %v777 = vxor.u32 %v776, 2147483648
    %v778 = vmul.f32 %v777, 1.442695
    %v779 = vpow.pop %v778
    %v780 = vadd.f32 %v779, 1.0
    %v781 = vrcp.pop %v780
    %v782 = vmul.f32 1.0, %v781
    %v783 = vmul.f32 %v775, %v764
    %v784 = vadd.f32 %v687, %v783
    %v785 = vtanh.pop %v784
    %v786 = vsub.f32 1.0, %v782
    %v787 = vmul.f32 %v786, %v785
    %v788 = vmul.f32 %v782, %v678
    %v789 = vadd.f32 %v787, %v788
    %v790 = vpack.c.bf16 %v789, %v789
    %s791 = scalar_lea.vmem [#allocation6], 8
    %792 = vst [vmem:[%s791] sm:$0xf] %v790
    %s793 = smul.u32 3, 3
    %s794 = smul.addr %s793, 8
    %s795 = scalar_lea.vmem [#allocation2], %s794
    %v796 = vld [vmem:[%s795] sm:$0xff]
    %v797 = vld [vmem:[%s795 + $0x8] sm:$0xff]
    %v798 = vld [vmem:[%s795 + $0x10] sm:$0xff]
    %799 = vmatprep.subr.bf16.mxu0 %v441
    %800 = vmatpush1.bf16.msra.mxu0 %v440
    %801 = vmatprep.subr.bf16.mxu0 %v438
    %802 = vmatpush1.bf16.msra.mxu0 %v437
    %803 = vmatprep.subr.bf16.mxu0 %v435
    %804 = vmatpush1.bf16.msra.mxu0 %v434
    %805 = vmatprep.subr.bf16.mxu0 %v432
    %806 = vmatpush1.bf16.msra.mxu0 %v431
    %807 = vmatprep.subr.bf16.mxu0 %v429
    %808 = vmatpush1.bf16.msra.mxu0 %v428
    %809 = vmatprep.subr.bf16.mxu0 %v426
    %810 = vmatpush1.bf16.msra.mxu0 %v425
    %811 = vmatprep.subr.bf16.mxu0 %v423
    %812 = vmatpush1.bf16.msra.mxu0 %v422
    %813 = vmatprep.subr.bf16.mxu0 %v420
    %814 = vmatpush1.bf16.msra.mxu0 %v419
    %815 = vmatprep.subr.bf16.mxu0 0
    %816 = vmatpush2.bf16.msra.mxu0 0
    %817 = vmatprep.subr.bf16.mxu0 0
    %818 = vmatpush2.bf16.msra.mxu0 0
    %819 = vmatprep.subr.bf16.mxu0 0
    %820 = vmatpush2.bf16.msra.mxu0 0
    %821 = vmatprep.subr.bf16.mxu0 0
    %822 = vmatpush2.bf16.msra.mxu0 0
    %823 = vmatprep.subr.bf16.mxu0 0
    %824 = vmatpush2.bf16.msra.mxu0 0
    %825 = vmatprep.subr.bf16.mxu0 0
    %826 = vmatpush2.bf16.msra.mxu0 0
    %827 = vmatprep.subr.bf16.mxu0 0
    %828 = vmatpush2.bf16.msra.mxu0 0
    %829 = vmatprep.subr.bf16.mxu0 0
    %830 = vmatpush2.bf16.msra.mxu0 0
    %831 = vmatprep.mubr.bf16.mxu0 0
    %832 = vmatmul.mubr.bf16.gmra.mxu0 %v790
    %v833 = vpop.f32.mrf.mxu0
    %v834 = vadd.f32 %v327, %v833
    %v835 = vpop.f32.mrf.mxu0
    %v836 = vadd.f32 %v331, %v835
    %v837 = vpop.f32.mrf.mxu0
    %v838 = vpop.f32.mrf.mxu0
    %839 = vdwg.mxu0
    %840 = vmatprep.subr.bf16.mxu0 0
    %841 = vmatpush1.bf16.msra.mxu0 %v442
    %842 = vmatprep.subr.bf16.mxu0 0
    %843 = vmatpush1.bf16.msra.mxu0 %v439
    %844 = vmatprep.subr.bf16.mxu0 0
    %845 = vmatpush1.bf16.msra.mxu0 %v436
    %846 = vmatprep.subr.bf16.mxu0 0
    %847 = vmatpush1.bf16.msra.mxu0 %v433
    %848 = vmatprep.subr.bf16.mxu0 0
    %849 = vmatpush1.bf16.msra.mxu0 %v430
    %850 = vmatprep.subr.bf16.mxu0 0
    %851 = vmatpush1.bf16.msra.mxu0 %v427
    %852 = vmatprep.subr.bf16.mxu0 0
    %853 = vmatpush1.bf16.msra.mxu0 %v424
    %854 = vmatprep.subr.bf16.mxu0 0
    %855 = vmatpush1.bf16.msra.mxu0 %v421
    %856 = vmatprep.subr.bf16.mxu0 0
    %857 = vmatpush2.bf16.msra.mxu0 0
    %858 = vmatprep.subr.bf16.mxu0 0
    %859 = vmatpush2.bf16.msra.mxu0 0
    %860 = vmatprep.subr.bf16.mxu0 0
    %861 = vmatpush2.bf16.msra.mxu0 0
    %862 = vmatprep.subr.bf16.mxu0 0
    %863 = vmatpush2.bf16.msra.mxu0 0
    %864 = vmatprep.subr.bf16.mxu0 0
    %865 = vmatpush2.bf16.msra.mxu0 0
    %866 = vmatprep.subr.bf16.mxu0 0
    %867 = vmatpush2.bf16.msra.mxu0 0
    %868 = vmatprep.subr.bf16.mxu0 0
    %869 = vmatpush2.bf16.msra.mxu0 0
    %870 = vmatprep.subr.bf16.mxu0 0
    %871 = vmatpush2.bf16.msra.mxu0 0
    %872 = vmatprep.mubr.bf16.mxu0 0
    %873 = vmatmul.mubr.bf16.gmra.mxu0 %v790
    %v874 = vpop.f32.mrf.mxu0
    %v875 = vadd.f32 %v335, %v874
    %v876 = vpop.f32.mrf.mxu0
    %v877 = vpop.f32.mrf.mxu0
    %v878 = vpop.f32.mrf.mxu0
    %879 = vdwg.mxu0
    %v880 = vadd.f32 %v796, %v834
    %v881 = vxor.u32 %v880, 2147483648
    %v882 = vmul.f32 %v881, 1.442695
    %v883 = vpow.pop %v882
    %v884 = vadd.f32 %v883, 1.0
    %v885 = vrcp.pop %v884
    %v886 = vmul.f32 1.0, %v885
    %v887 = vadd.f32 %v797, %v836
    %v888 = vxor.u32 %v887, 2147483648
    %v889 = vmul.f32 %v888, 1.442695
    %v890 = vpow.pop %v889
    %v891 = vadd.f32 %v890, 1.0
    %v892 = vrcp.pop %v891
    %v893 = vmul.f32 1.0, %v892
    %v894 = vmul.f32 %v886, %v875
    %v895 = vadd.f32 %v798, %v894
    %v896 = vtanh.pop %v895
    %v897 = vsub.f32 1.0, %v893
    %v898 = vmul.f32 %v897, %v896
    %v899 = vmul.f32 %v893, %v789
    %v900 = vadd.f32 %v898, %v899
    %v901 = vpack.c.bf16 %v900, %v900
    %s902 = scalar_lea.vmem [#allocation6], 12
    %903 = vst [vmem:[%s902] sm:$0xf] %v901
    %s904 = smul.u32 4, 3
    %s905 = smul.addr %s904, 8
    %s906 = scalar_lea.vmem [#allocation2], %s905
    %v907 = vld [vmem:[%s906] sm:$0xff]
    %v908 = vld [vmem:[%s906 + $0x8] sm:$0xff]
    %v909 = vld [vmem:[%s906 + $0x10] sm:$0xff]
    %910 = vmatprep.subr.bf16.mxu0 %v441
    %911 = vmatpush1.bf16.msra.mxu0 %v440
    %912 = vmatprep.subr.bf16.mxu0 %v438
    %913 = vmatpush1.bf16.msra.mxu0 %v437
    %914 = vmatprep.subr.bf16.mxu0 %v435
    %915 = vmatpush1.bf16.msra.mxu0 %v434
    %916 = vmatprep.subr.bf16.mxu0 %v432
    %917 = vmatpush1.bf16.msra.mxu0 %v431
    %918 = vmatprep.subr.bf16.mxu0 %v429
    %919 = vmatpush1.bf16.msra.mxu0 %v428
    %920 = vmatprep.subr.bf16.mxu0 %v426
    %921 = vmatpush1.bf16.msra.mxu0 %v425
    %922 = vmatprep.subr.bf16.mxu0 %v423
    %923 = vmatpush1.bf16.msra.mxu0 %v422
    %924 = vmatprep.subr.bf16.mxu0 %v420
    %925 = vmatpush1.bf16.msra.mxu0 %v419
    %926 = vmatprep.subr.bf16.mxu0 0
    %927 = vmatpush2.bf16.msra.mxu0 0
    %928 = vmatprep.subr.bf16.mxu0 0
    %929 = vmatpush2.bf16.msra.mxu0 0
    %930 = vmatprep.subr.bf16.mxu0 0
    %931 = vmatpush2.bf16.msra.mxu0 0
    %932 = vmatprep.subr.bf16.mxu0 0
    %933 = vmatpush2.bf16.msra.mxu0 0
    %934 = vmatprep.subr.bf16.mxu0 0
    %935 = vmatpush2.bf16.msra.mxu0 0
    %936 = vmatprep.subr.bf16.mxu0 0
    %937 = vmatpush2.bf16.msra.mxu0 0
    %938 = vmatprep.subr.bf16.mxu0 0
    %939 = vmatpush2.bf16.msra.mxu0 0
    %940 = vmatprep.subr.bf16.mxu0 0
    %941 = vmatpush2.bf16.msra.mxu0 0
    %942 = vmatprep.mubr.bf16.mxu0 0
    %943 = vmatmul.mubr.bf16.gmra.mxu0 %v901
    %v944 = vpop.f32.mrf.mxu0
    %v945 = vadd.f32 %v327, %v944
    %v946 = vpop.f32.mrf.mxu0
    %v947 = vadd.f32 %v331, %v946
    %v948 = vpop.f32.mrf.mxu0
    %v949 = vpop.f32.mrf.mxu0
    %950 = vdwg.mxu0
    %951 = vmatprep.subr.bf16.mxu0 0
    %952 = vmatpush1.bf16.msra.mxu0 %v442
    %953 = vmatprep.subr.bf16.mxu0 0
    %954 = vmatpush1.bf16.msra.mxu0 %v439
    %955 = vmatprep.subr.bf16.mxu0 0
    %956 = vmatpush1.bf16.msra.mxu0 %v436
    %957 = vmatprep.subr.bf16.mxu0 0
    %958 = vmatpush1.bf16.msra.mxu0 %v433
    %959 = vmatprep.subr.bf16.mxu0 0
    %960 = vmatpush1.bf16.msra.mxu0 %v430
    %961 = vmatprep.subr.bf16.mxu0 0
    %962 = vmatpush1.bf16.msra.mxu0 %v427
    %963 = vmatprep.subr.bf16.mxu0 0
    %964 = vmatpush1.bf16.msra.mxu0 %v424
    %965 = vmatprep.subr.bf16.mxu0 0
    %966 = vmatpush1.bf16.msra.mxu0 %v421
    %967 = vmatprep.subr.bf16.mxu0 0
    %968 = vmatpush2.bf16.msra.mxu0 0
    %969 = vmatprep.subr.bf16.mxu0 0
    %970 = vmatpush2.bf16.msra.mxu0 0
    %971 = vmatprep.subr.bf16.mxu0 0
    %972 = vmatpush2.bf16.msra.mxu0 0
    %973 = vmatprep.subr.bf16.mxu0 0
    %974 = vmatpush2.bf16.msra.mxu0 0
    %975 = vmatprep.subr.bf16.mxu0 0
    %976 = vmatpush2.bf16.msra.mxu0 0
    %977 = vmatprep.subr.bf16.mxu0 0
    %978 = vmatpush2.bf16.msra.mxu0 0
    %979 = vmatprep.subr.bf16.mxu0 0
    %980 = vmatpush2.bf16.msra.mxu0 0
    %981 = vmatprep.subr.bf16.mxu0 0
    %982 = vmatpush2.bf16.msra.mxu0 0
    %983 = vmatprep.mubr.bf16.mxu0 0
    %984 = vmatmul.mubr.bf16.gmra.mxu0 %v901
    %v985 = vpop.f32.mrf.mxu0
    %v986 = vadd.f32 %v335, %v985
    %v987 = vpop.f32.mrf.mxu0
    %v988 = vpop.f32.mrf.mxu0
    %v989 = vpop.f32.mrf.mxu0
    %990 = vdwg.mxu0
    %v991 = vadd.f32 %v907, %v945
    %v992 = vxor.u32 %v991, 2147483648
    %v993 = vmul.f32 %v992, 1.442695
    %v994 = vpow.pop %v993
    %v995 = vadd.f32 %v994, 1.0
    %v996 = vrcp.pop %v995
    %v997 = vmul.f32 1.0, %v996
    %v998 = vadd.f32 %v908, %v947
    %v999 = vxor.u32 %v998, 2147483648
    %v1000 = vmul.f32 %v999, 1.442695
    %v1001 = vpow.pop %v1000
    %v1002 = vadd.f32 %v1001, 1.0
    %v1003 = vrcp.pop %v1002
    %v1004 = vmul.f32 1.0, %v1003
    %v1005 = vmul.f32 %v997, %v986
    %v1006 = vadd.f32 %v909, %v1005
    %v1007 = vtanh.pop %v1006
    %v1008 = vsub.f32 1.0, %v1004
    %v1009 = vmul.f32 %v1008, %v1007
    %v1010 = vmul.f32 %v1004, %v900
    %v1011 = vadd.f32 %v1009, %v1010
    %v1012 = vpack.c.bf16 %v1011, %v1011
    %s1013 = scalar_lea.vmem [#allocation6], 16
    %1014 = vst [vmem:[%s1013] sm:$0xf] %v1012
    %s1015 = smul.u32 5, 3
    %s1016 = smul.addr %s1015, 8
    %s1017 = scalar_lea.vmem [#allocation2], %s1016
    %v1018 = vld [vmem:[%s1017] sm:$0xff]
    %v1019 = vld [vmem:[%s1017 + $0x8] sm:$0xff]
    %v1020 = vld [vmem:[%s1017 + $0x10] sm:$0xff]
    %1021 = vmatprep.subr.bf16.mxu0 %v441
    %1022 = vmatpush1.bf16.msra.mxu0 %v440
    %1023 = vmatprep.subr.bf16.mxu0 %v438
    %1024 = vmatpush1.bf16.msra.mxu0 %v437
    %1025 = vmatprep.subr.bf16.mxu0 %v435
    %1026 = vmatpush1.bf16.msra.mxu0 %v434
    %1027 = vmatprep.subr.bf16.mxu0 %v432
    %1028 = vmatpush1.bf16.msra.mxu0 %v431
    %1029 = vmatprep.subr.bf16.mxu0 %v429
    %1030 = vmatpush1.bf16.msra.mxu0 %v428
    %1031 = vmatprep.subr.bf16.mxu0 %v426
    %1032 = vmatpush1.bf16.msra.mxu0 %v425
    %1033 = vmatprep.subr.bf16.mxu0 %v423
    %1034 = vmatpush1.bf16.msra.mxu0 %v422
    %1035 = vmatprep.subr.bf16.mxu0 %v420
    %1036 = vmatpush1.bf16.msra.mxu0 %v419
    %1037 = vmatprep.subr.bf16.mxu0 0
    %1038 = vmatpush2.bf16.msra.mxu0 0
    %1039 = vmatprep.subr.bf16.mxu0 0
    %1040 = vmatpush2.bf16.msra.mxu0 0
    %1041 = vmatprep.subr.bf16.mxu0 0
    %1042 = vmatpush2.bf16.msra.mxu0 0
    %1043 = vmatprep.subr.bf16.mxu0 0
    %1044 = vmatpush2.bf16.msra.mxu0 0
    %1045 = vmatprep.subr.bf16.mxu0 0
    %1046 = vmatpush2.bf16.msra.mxu0 0
    %1047 = vmatprep.subr.bf16.mxu0 0
    %1048 = vmatpush2.bf16.msra.mxu0 0
    %1049 = vmatprep.subr.bf16.mxu0 0
    %1050 = vmatpush2.bf16.msra.mxu0 0
    %1051 = vmatprep.subr.bf16.mxu0 0
    %1052 = vmatpush2.bf16.msra.mxu0 0
    %1053 = vmatprep.mubr.bf16.mxu0 0
    %1054 = vmatmul.mubr.bf16.gmra.mxu0 %v1012
    %v1055 = vpop.f32.mrf.mxu0
    %v1056 = vadd.f32 %v327, %v1055
    %v1057 = vpop.f32.mrf.mxu0
    %v1058 = vadd.f32 %v331, %v1057
    %v1059 = vpop.f32.mrf.mxu0
    %v1060 = vpop.f32.mrf.mxu0
    %1061 = vdwg.mxu0
    %1062 = vmatprep.subr.bf16.mxu0 0
    %1063 = vmatpush1.bf16.msra.mxu0 %v442
    %1064 = vmatprep.subr.bf16.mxu0 0
    %1065 = vmatpush1.bf16.msra.mxu0 %v439
    %1066 = vmatprep.subr.bf16.mxu0 0
    %1067 = vmatpush1.bf16.msra.mxu0 %v436
    %1068 = vmatprep.subr.bf16.mxu0 0
    %1069 = vmatpush1.bf16.msra.mxu0 %v433
    %1070 = vmatprep.subr.bf16.mxu0 0
    %1071 = vmatpush1.bf16.msra.mxu0 %v430
    %1072 = vmatprep.subr.bf16.mxu0 0
    %1073 = vmatpush1.bf16.msra.mxu0 %v427
    %1074 = vmatprep.subr.bf16.mxu0 0
    %1075 = vmatpush1.bf16.msra.mxu0 %v424
    %1076 = vmatprep.subr.bf16.mxu0 0
    %1077 = vmatpush1.bf16.msra.mxu0 %v421
    %1078 = vmatprep.subr.bf16.mxu0 0
    %1079 = vmatpush2.bf16.msra.mxu0 0
    %1080 = vmatprep.subr.bf16.mxu0 0
    %1081 = vmatpush2.bf16.msra.mxu0 0
    %1082 = vmatprep.subr.bf16.mxu0 0
    %1083 = vmatpush2.bf16.msra.mxu0 0
    %1084 = vmatprep.subr.bf16.mxu0 0
    %1085 = vmatpush2.bf16.msra.mxu0 0
    %1086 = vmatprep.subr.bf16.mxu0 0
    %1087 = vmatpush2.bf16.msra.mxu0 0
    %1088 = vmatprep.subr.bf16.mxu0 0
    %1089 = vmatpush2.bf16.msra.mxu0 0
    %1090 = vmatprep.subr.bf16.mxu0 0
    %1091 = vmatpush2.bf16.msra.mxu0 0
    %1092 = vmatprep.subr.bf16.mxu0 0
    %1093 = vmatpush2.bf16.msra.mxu0 0
    %1094 = vmatprep.mubr.bf16.mxu0 0
    %1095 = vmatmul.mubr.bf16.gmra.mxu0 %v1012
    %v1096 = vpop.f32.mrf.mxu0
    %v1097 = vadd.f32 %v335, %v1096
    %v1098 = vpop.f32.mrf.mxu0
    %v1099 = vpop.f32.mrf.mxu0
    %v1100 = vpop.f32.mrf.mxu0
    %1101 = vdwg.mxu0
    %v1102 = vadd.f32 %v1018, %v1056
    %v1103 = vxor.u32 %v1102, 2147483648
    %v1104 = vmul.f32 %v1103, 1.442695
    %v1105 = vpow.pop %v1104
    %v1106 = vadd.f32 %v1105, 1.0
    %v1107 = vrcp.pop %v1106
    %v1108 = vmul.f32 1.0, %v1107
    %v1109 = vadd.f32 %v1019, %v1058
    %v1110 = vxor.u32 %v1109, 2147483648
    %v1111 = vmul.f32 %v1110, 1.442695
    %v1112 = vpow.pop %v1111
    %v1113 = vadd.f32 %v1112, 1.0
    %v1114 = vrcp.pop %v1113
    %v1115 = vmul.f32 1.0, %v1114
    %v1116 = vmul.f32 %v1108, %v1097
    %v1117 = vadd.f32 %v1020, %v1116
    %v1118 = vtanh.pop %v1117
    %v1119 = vsub.f32 1.0, %v1115
    %v1120 = vmul.f32 %v1119, %v1118
    %v1121 = vmul.f32 %v1115, %v1011
    %v1122 = vadd.f32 %v1120, %v1121
    %v1123 = vpack.c.bf16 %v1122, %v1122
    %s1124 = scalar_lea.vmem [#allocation6], 20
    %1125 = vst [vmem:[%s1124] sm:$0xf] %v1123
    %s1126 = smul.u32 6, 3
    %s1127 = smul.addr %s1126, 8
    %s1128 = scalar_lea.vmem [#allocation2], %s1127
    %v1129 = vld [vmem:[%s1128] sm:$0xff]
    %v1130 = vld [vmem:[%s1128 + $0x8] sm:$0xff]
    %v1131 = vld [vmem:[%s1128 + $0x10] sm:$0xff]
    %1132 = vmatprep.subr.bf16.mxu0 %v441
    %1133 = vmatpush1.bf16.msra.mxu0 %v440
    %1134 = vmatprep.subr.bf16.mxu0 %v438
    %1135 = vmatpush1.bf16.msra.mxu0 %v437
    %1136 = vmatprep.subr.bf16.mxu0 %v435
    %1137 = vmatpush1.bf16.msra.mxu0 %v434
    %1138 = vmatprep.subr.bf16.mxu0 %v432
    %1139 = vmatpush1.bf16.msra.mxu0 %v431
    %1140 = vmatprep.subr.bf16.mxu0 %v429
    %1141 = vmatpush1.bf16.msra.mxu0 %v428
    %1142 = vmatprep.subr.bf16.mxu0 %v426
    %1143 = vmatpush1.bf16.msra.mxu0 %v425
    %1144 = vmatprep.subr.bf16.mxu0 %v423
    %1145 = vmatpush1.bf16.msra.mxu0 %v422
    %1146 = vmatprep.subr.bf16.mxu0 %v420
    %1147 = vmatpush1.bf16.msra.mxu0 %v419
    %1148 = vmatprep.subr.bf16.mxu0 0
    %1149 = vmatpush2.bf16.msra.mxu0 0
    %1150 = vmatprep.subr.bf16.mxu0 0
    %1151 = vmatpush2.bf16.msra.mxu0 0
    %1152 = vmatprep.subr.bf16.mxu0 0
    %1153 = vmatpush2.bf16.msra.mxu0 0
    %1154 = vmatprep.subr.bf16.mxu0 0
    %1155 = vmatpush2.bf16.msra.mxu0 0
    %1156 = vmatprep.subr.bf16.mxu0 0
    %1157 = vmatpush2.bf16.msra.mxu0 0
    %1158 = vmatprep.subr.bf16.mxu0 0
    %1159 = vmatpush2.bf16.msra.mxu0 0
    %1160 = vmatprep.subr.bf16.mxu0 0
    %1161 = vmatpush2.bf16.msra.mxu0 0
    %1162 = vmatprep.subr.bf16.mxu0 0
    %1163 = vmatpush2.bf16.msra.mxu0 0
    %1164 = vmatprep.mubr.bf16.mxu0 0
    %1165 = vmatmul.mubr.bf16.gmra.mxu0 %v1123
    %v1166 = vpop.f32.mrf.mxu0
    %v1167 = vadd.f32 %v327, %v1166
    %v1168 = vpop.f32.mrf.mxu0
    %v1169 = vadd.f32 %v331, %v1168
    %v1170 = vpop.f32.mrf.mxu0
    %v1171 = vpop.f32.mrf.mxu0
    %1172 = vdwg.mxu0
    %1173 = vmatprep.subr.bf16.mxu0 0
    %1174 = vmatpush1.bf16.msra.mxu0 %v442
    %1175 = vmatprep.subr.bf16.mxu0 0
    %1176 = vmatpush1.bf16.msra.mxu0 %v439
    %1177 = vmatprep.subr.bf16.mxu0 0
    %1178 = vmatpush1.bf16.msra.mxu0 %v436
    %1179 = vmatprep.subr.bf16.mxu0 0
    %1180 = vmatpush1.bf16.msra.mxu0 %v433
    %1181 = vmatprep.subr.bf16.mxu0 0
    %1182 = vmatpush1.bf16.msra.mxu0 %v430
    %1183 = vmatprep.subr.bf16.mxu0 0
    %1184 = vmatpush1.bf16.msra.mxu0 %v427
    %1185 = vmatprep.subr.bf16.mxu0 0
    %1186 = vmatpush1.bf16.msra.mxu0 %v424
    %1187 = vmatprep.subr.bf16.mxu0 0
    %1188 = vmatpush1.bf16.msra.mxu0 %v421
    %1189 = vmatprep.subr.bf16.mxu0 0
    %1190 = vmatpush2.bf16.msra.mxu0 0
    %1191 = vmatprep.subr.bf16.mxu0 0
    %1192 = vmatpush2.bf16.msra.mxu0 0
    %1193 = vmatprep.subr.bf16.mxu0 0
    %1194 = vmatpush2.bf16.msra.mxu0 0
    %1195 = vmatprep.subr.bf16.mxu0 0
    %1196 = vmatpush2.bf16.msra.mxu0 0
    %1197 = vmatprep.subr.bf16.mxu0 0
    %1198 = vmatpush2.bf16.msra.mxu0 0
    %1199 = vmatprep.subr.bf16.mxu0 0
    %1200 = vmatpush2.bf16.msra.mxu0 0
    %1201 = vmatprep.subr.bf16.mxu0 0
    %1202 = vmatpush2.bf16.msra.mxu0 0
    %1203 = vmatprep.subr.bf16.mxu0 0
    %1204 = vmatpush2.bf16.msra.mxu0 0
    %1205 = vmatprep.mubr.bf16.mxu0 0
    %1206 = vmatmul.mubr.bf16.gmra.mxu0 %v1123
    %v1207 = vpop.f32.mrf.mxu0
    %v1208 = vadd.f32 %v335, %v1207
    %v1209 = vpop.f32.mrf.mxu0
    %v1210 = vpop.f32.mrf.mxu0
    %v1211 = vpop.f32.mrf.mxu0
    %1212 = vdwg.mxu0
    %v1213 = vadd.f32 %v1129, %v1167
    %v1214 = vxor.u32 %v1213, 2147483648
    %v1215 = vmul.f32 %v1214, 1.442695
    %v1216 = vpow.pop %v1215
    %v1217 = vadd.f32 %v1216, 1.0
    %v1218 = vrcp.pop %v1217
    %v1219 = vmul.f32 1.0, %v1218
    %v1220 = vadd.f32 %v1130, %v1169
    %v1221 = vxor.u32 %v1220, 2147483648
    %v1222 = vmul.f32 %v1221, 1.442695
    %v1223 = vpow.pop %v1222
    %v1224 = vadd.f32 %v1223, 1.0
    %v1225 = vrcp.pop %v1224
    %v1226 = vmul.f32 1.0, %v1225
    %v1227 = vmul.f32 %v1219, %v1208
    %v1228 = vadd.f32 %v1131, %v1227
    %v1229 = vtanh.pop %v1228
    %v1230 = vsub.f32 1.0, %v1226
    %v1231 = vmul.f32 %v1230, %v1229
    %v1232 = vmul.f32 %v1226, %v1122
    %v1233 = vadd.f32 %v1231, %v1232
    %v1234 = vpack.c.bf16 %v1233, %v1233
    %s1235 = scalar_lea.vmem [#allocation6], 24
    %1236 = vst [vmem:[%s1235] sm:$0xf] %v1234
    %s1237 = smul.u32 7, 3
    %s1238 = smul.addr %s1237, 8
    %s1239 = scalar_lea.vmem [#allocation2], %s1238
    %v1240 = vld [vmem:[%s1239] sm:$0xff]
    %v1241 = vld [vmem:[%s1239 + $0x8] sm:$0xff]
    %v1242 = vld [vmem:[%s1239 + $0x10] sm:$0xff]
    %1243 = vmatprep.subr.bf16.mxu0 %v441
    %1244 = vmatpush1.bf16.msra.mxu0 %v440
    %1245 = vmatprep.subr.bf16.mxu0 %v438
    %1246 = vmatpush1.bf16.msra.mxu0 %v437
    %1247 = vmatprep.subr.bf16.mxu0 %v435
    %1248 = vmatpush1.bf16.msra.mxu0 %v434
    %1249 = vmatprep.subr.bf16.mxu0 %v432
    %1250 = vmatpush1.bf16.msra.mxu0 %v431
    %1251 = vmatprep.subr.bf16.mxu0 %v429
    %1252 = vmatpush1.bf16.msra.mxu0 %v428
    %1253 = vmatprep.subr.bf16.mxu0 %v426
    %1254 = vmatpush1.bf16.msra.mxu0 %v425
    %1255 = vmatprep.subr.bf16.mxu0 %v423
    %1256 = vmatpush1.bf16.msra.mxu0 %v422
    %1257 = vmatprep.subr.bf16.mxu0 %v420
    %1258 = vmatpush1.bf16.msra.mxu0 %v419
    %1259 = vmatprep.subr.bf16.mxu0 0
    %1260 = vmatpush2.bf16.msra.mxu0 0
    %1261 = vmatprep.subr.bf16.mxu0 0
    %1262 = vmatpush2.bf16.msra.mxu0 0
    %1263 = vmatprep.subr.bf16.mxu0 0
    %1264 = vmatpush2.bf16.msra.mxu0 0
    %1265 = vmatprep.subr.bf16.mxu0 0
    %1266 = vmatpush2.bf16.msra.mxu0 0
    %1267 = vmatprep.subr.bf16.mxu0 0
    %1268 = vmatpush2.bf16.msra.mxu0 0
    %1269 = vmatprep.subr.bf16.mxu0 0
    %1270 = vmatpush2.bf16.msra.mxu0 0
    %1271 = vmatprep.subr.bf16.mxu0 0
    %1272 = vmatpush2.bf16.msra.mxu0 0
    %1273 = vmatprep.subr.bf16.mxu0 0
    %1274 = vmatpush2.bf16.msra.mxu0 0
    %1275 = vmatprep.mubr.bf16.mxu0 0
    %1276 = vmatmul.mubr.bf16.gmra.mxu0 %v1234
    %v1277 = vpop.f32.mrf.mxu0
    %v1278 = vadd.f32 %v327, %v1277
    %v1279 = vpop.f32.mrf.mxu0
    %v1280 = vadd.f32 %v331, %v1279
    %v1281 = vpop.f32.mrf.mxu0
    %v1282 = vpop.f32.mrf.mxu0
    %1283 = vdwg.mxu0
    %1284 = vmatprep.subr.bf16.mxu0 0
    %1285 = vmatpush1.bf16.msra.mxu0 %v442
    %1286 = vmatprep.subr.bf16.mxu0 0
    %1287 = vmatpush1.bf16.msra.mxu0 %v439
    %1288 = vmatprep.subr.bf16.mxu0 0
    %1289 = vmatpush1.bf16.msra.mxu0 %v436
    %1290 = vmatprep.subr.bf16.mxu0 0
    %1291 = vmatpush1.bf16.msra.mxu0 %v433
    %1292 = vmatprep.subr.bf16.mxu0 0
    %1293 = vmatpush1.bf16.msra.mxu0 %v430
    %1294 = vmatprep.subr.bf16.mxu0 0
    %1295 = vmatpush1.bf16.msra.mxu0 %v427
    %1296 = vmatprep.subr.bf16.mxu0 0
    %1297 = vmatpush1.bf16.msra.mxu0 %v424
    %1298 = vmatprep.subr.bf16.mxu0 0
    %1299 = vmatpush1.bf16.msra.mxu0 %v421
    %1300 = vmatprep.subr.bf16.mxu0 0
    %1301 = vmatpush2.bf16.msra.mxu0 0
    %1302 = vmatprep.subr.bf16.mxu0 0
    %1303 = vmatpush2.bf16.msra.mxu0 0
    %1304 = vmatprep.subr.bf16.mxu0 0
    %1305 = vmatpush2.bf16.msra.mxu0 0
    %1306 = vmatprep.subr.bf16.mxu0 0
    %1307 = vmatpush2.bf16.msra.mxu0 0
    %1308 = vmatprep.subr.bf16.mxu0 0
    %1309 = vmatpush2.bf16.msra.mxu0 0
    %1310 = vmatprep.subr.bf16.mxu0 0
    %1311 = vmatpush2.bf16.msra.mxu0 0
    %1312 = vmatprep.subr.bf16.mxu0 0
    %1313 = vmatpush2.bf16.msra.mxu0 0
    %1314 = vmatprep.subr.bf16.mxu0 0
    %1315 = vmatpush2.bf16.msra.mxu0 0
    %1316 = vmatprep.mubr.bf16.mxu0 0
    %1317 = vmatmul.mubr.bf16.gmra.mxu0 %v1234
    %v1318 = vpop.f32.mrf.mxu0
    %v1319 = vadd.f32 %v335, %v1318
    %v1320 = vpop.f32.mrf.mxu0
    %v1321 = vpop.f32.mrf.mxu0
    %v1322 = vpop.f32.mrf.mxu0
    %1323 = vdwg.mxu0
    %v1324 = vadd.f32 %v1240, %v1278
    %v1325 = vxor.u32 %v1324, 2147483648
    %v1326 = vmul.f32 %v1325, 1.442695
    %v1327 = vpow.pop %v1326
    %v1328 = vadd.f32 %v1327, 1.0
    %v1329 = vrcp.pop %v1328
    %v1330 = vmul.f32 1.0, %v1329
    %v1331 = vadd.f32 %v1241, %v1280
    %v1332 = vxor.u32 %v1331, 2147483648
    %v1333 = vmul.f32 %v1332, 1.442695
    %v1334 = vpow.pop %v1333
    %v1335 = vadd.f32 %v1334, 1.0
    %v1336 = vrcp.pop %v1335
    %v1337 = vmul.f32 1.0, %v1336
    %v1338 = vmul.f32 %v1330, %v1319
    %v1339 = vadd.f32 %v1242, %v1338
    %v1340 = vtanh.pop %v1339
    %v1341 = vsub.f32 1.0, %v1337
    %v1342 = vmul.f32 %v1341, %v1340
    %v1343 = vmul.f32 %v1337, %v1233
    %v1344 = vadd.f32 %v1342, %v1343
    %v1345 = vpack.c.bf16 %v1344, %v1344
    %s1346 = scalar_lea.vmem [#allocation6], 28
    %1347 = vst [vmem:[%s1346] sm:$0xf] %v1345
    // Predicated region
    $region26: #{tpu_custom_call.1} parent=1 // pred_check
      _
    $region27: #{tpu_custom_call.1} parent=1 // pred_check_branch
      %1349 = sbr.rel (0) target = $region29
    $region28: #{tpu_custom_call.1} parent=1 // pred_region
      %s1351 = ssub.s32 512, 512
      %1352 = vsyncadd [#allocation5], %s1351
      %s1353 = sshll.u32 [#allocation6], 4
      %s1354 = int_to_ptr.vmem [resolvable:$true] %s1353
      %1359 = dma.vmem_to_hbm [thread:$0]  %s1354, 512, %s5, [#allocation5], 64, 64, 4
    $region29: #{tpu_custom_call.1} parent=1 // pred_fallthru
      _
    // Predicated region
    $region30: #{tpu_custom_call.1} parent=1 // pred_check
      _
    $region31: #{tpu_custom_call.1} parent=1 // pred_check_branch
      %1361 = sbr.rel (0) target = $region33
    $region32: #{tpu_custom_call.1} parent=1 // pred_region
      %1362 = dma.done [#allocation5], 512
    $region33: #{tpu_custom_call.1} parent=1 // pred_fallthru
      _
    %1363 = vsyncpa [#allocation4], 1
    %1364 = vsyncpa [#allocation5], 1

</llo_original>
